<compile_context>
chip_gen: v6e
topology: v6e:2x2x1
jax: 0.10.0
libtpu: 0.0.40
codegen_flags: <defaults>
</compile_context>

<pallas_src>
import functools

import jax
import jax.numpy as jnp
from jax.experimental import pallas as pl
from jax.experimental.pallas import tpu as pltpu

EPS = 1e-5  # PyTorch BatchNorm2d default eps


# ---------------------------------------------------------------------------
# Host-side helpers
# ---------------------------------------------------------------------------
def _interp_matrix(n_in, n_out):
    """1-D bilinear interpolation operator, align_corners=True (PyTorch)."""
    o = jnp.arange(n_out, dtype=jnp.float32)
    src = o * (n_in - 1) / max(n_out - 1, 1)
    lo = jnp.floor(src).astype(jnp.int32)
    hi = jnp.minimum(lo + 1, n_in - 1)
    frac = src - lo.astype(jnp.float32)
    m = jnp.zeros((n_out, n_in), jnp.float32)
    m = m.at[jnp.arange(n_out), lo].add(1.0 - frac)
    m = m.at[jnp.arange(n_out), hi].add(frac)
    return m


def _border_masks(h2, w2):
    """(9, H2*W2) validity masks for the 9 taps of a padding=1 3x3 conv on the
    flattened spatial axis; they also zero the pltpu.roll wrap-around."""
    s2 = h2 * w2
    r = jnp.arange(s2, dtype=jnp.int32) // w2
    c = jnp.arange(s2, dtype=jnp.int32) % w2
    rows = []
    for dh in (-1, 0, 1):
        for dw in (-1, 0, 1):
            ok = (r + dh >= 0) & (r + dh < h2) & (c + dw >= 0) & (c + dw < w2)
            rows.append(ok.astype(jnp.float32))
    return jnp.stack(rows, axis=0)


# ---------------------------------------------------------------------------
# Fused kernel.  Layout inside: (channels, H2*W2), spatial flat on lanes.
# ---------------------------------------------------------------------------
def _upatt_kernel(x1_ref, x2_ref, ut_ref, mw_ref,
                  prew_ref, bpre_ref, wx_ref, bx_ref, wp_ref, bp_ref,
                  c1w_ref, c1sc_ref, c1sh_ref, c2w_ref, c2sc_ref, c2sh_ref,
                  o_ref, *, w2, c_half):
    f32, bf16 = jnp.float32, jnp.bfloat16
    x1 = x1_ref[0].astype(bf16)                       # (C_in, S1)
    x2 = x2_ref[0]                                    # (C_skip, S2), f32
    s2 = x2.shape[-1]
    mw = mw_ref[...]                                  # (9, S2) f32

    # conv_reduce + BN-folded W_g applied BEFORE the upsample (associativity):
    # never materialises the full-width `up` tensor.
    pre = jnp.dot(prew_ref[...], x1, preferred_element_type=f32)   # (C_half+F_int, S1)
    ups = jnp.dot(pre.astype(bf16), ut_ref[...],
                  preferred_element_type=f32) + bpre_ref[...]      # (C_half+F_int, S2)
    x1r = ups[:c_half]                                # conv_reduce(up(x1))
    g1 = ups[c_half:]                                 # BN_g(W_g(conv_reduce(up)))

    # W_x branch + psi gate (conv biases + BN affines folded on the host).
    x1a = jnp.dot(wx_ref[...], x2.astype(bf16),
                  preferred_element_type=f32) + bx_ref[...]        # (F_int, S2)
    a = jnp.maximum(g1 + x1a, 0.0)
    psi = jax.nn.sigmoid(jnp.sum(a * wp_ref[...], axis=0, keepdims=True)
                         + bp_ref[...])                            # (1, S2)

    # gating + channel concat, matching torch.cat([attended_skip, reduced_up]).
    cat = jnp.concatenate([x2 * psi, x1r], axis=0)    # (C_in, S2) f32

    def conv3x3_bn_relu(x, w_s, sc, sh):
        # x: (Cin, S2) f32; w_s: (Cout, 9*Cin) bf16.  The 9 taps are XLU lane
        # rotations of x, border-masked, stacked on sublanes -> ONE matmul.
        taps = []
        for dh in range(3):
            for dw in range(3):
                off = (dh - 1) * w2 + (dw - 1)
                if off == 0:
                    taps.append(x)                    # centre tap, mask == 1
                else:
                    t = pltpu.roll(x, (-off) % s2, 1)
                    taps.append(t * mw[3 * dh + dw:3 * dh + dw + 1, :])
        taps = jnp.concatenate(taps, axis=0).astype(bf16)          # (9*Cin, S2)
        acc = jnp.dot(w_s, taps, preferred_element_type=f32)       # (Cout, S2)
        return jnp.maximum(acc * sc + sh, 0.0)

    h = conv3x3_bn_relu(cat, c1w_ref[...], c1sc_ref[...], c1sh_ref[...])
    h = conv3x3_bn_relu(h, c2w_ref[...], c2sc_ref[...], c2sh_ref[...])
    o_ref[0] = h.astype(o_ref.dtype)                  # lane-dense store


# ---------------------------------------------------------------------------
# Deterministic synthetic parameters + host-side folding
# ---------------------------------------------------------------------------
def init_params(key, c_in, c_out):
    c_half = c_in // 2
    f_int = c_out // 2
    ks = jax.random.split(key, 17)

    def w(k, shape, scale=0.2):
        return (scale * jax.random.normal(k, shape)).astype(jnp.float32)

    def bn_raw(k, c):
        k1, k2, k3, k4 = jax.random.split(k, 4)
        gamma = (1.0 + 0.1 * jax.random.normal(k1, (c,))).astype(jnp.float32)
        beta = (0.1 * jax.random.normal(k2, (c,))).astype(jnp.float32)
        mean = (0.1 * jax.random.normal(k3, (c,))).astype(jnp.float32)
        var = jax.random.uniform(k4, (c,), minval=0.5, maxval=1.5).astype(jnp.float32)
        return gamma, beta, mean, var

    def bn_fold(p):
        gamma, beta, mean, var = p
        scale = gamma * jax.lax.rsqrt(var + EPS)
        return scale, beta - mean * scale

    raw = {
        'wr': w(ks[0], (c_half, c_in)), 'br': w(ks[1], (c_half,), 0.1),
        'wg': w(ks[2], (f_int, c_half)), 'bg': w(ks[3], (f_int,), 0.1),
        'bn_g': bn_raw(ks[4], f_int),
        'wx': w(ks[5], (f_int, c_out)), 'bx': w(ks[6], (f_int,), 0.1),
        'bn_x': bn_raw(ks[7], f_int),
        'wp': w(ks[8], (1, f_int)), 'bp': w(ks[9], (1,), 0.1),
        'bn_p': bn_raw(ks[10], 1),
        'c1w': w(ks[11], (c_out, c_in, 3, 3)), 'c1b': w(ks[12], (c_out,), 0.1),
        'bn_1': bn_raw(ks[13], c_out),
        'c2w': w(ks[14], (c_out, c_out, 3, 3)), 'c2b': w(ks[15], (c_out,), 0.1),
        'bn_2': bn_raw(ks[16], c_out),
    }

    gsc, gsh = bn_fold(raw['bn_g'])
    xsc, xsh = bn_fold(raw['bn_x'])
    psc, psh = bn_fold(raw['bn_p'])
    c1sc, c1sh = bn_fold(raw['bn_1'])
    c2sc, c2sh = bn_fold(raw['bn_2'])
    wr, br, wg, bg = raw['wr'], raw['br'], raw['wg'], raw['bg']

    fold = {
        # conv_reduce rows stacked with the BN_g-folded (W_g @ conv_reduce) rows;
        # both are applied before the upsample matmul.
        'preW': jnp.concatenate([wr, gsc[:, None] * (wg @ wr)], axis=0),
        'b_pre': jnp.concatenate([br, gsc * (wg @ br + bg) + gsh])[:, None],
        'wx': xsc[:, None] * raw['wx'],
        'bx': (xsc * raw['bx'] + xsh)[:, None],
        'wp': (psc * raw['wp']).T,
        'bp': (psc * raw['bp'] + psh).reshape(1, 1),
        # 3x3 conv weights restacked to (Cout, 9*Cin): tap index (3*dh+dw) major,
        # input channel minor; conv bias folded into the BN shift.
        'c1w': jnp.transpose(raw['c1w'], (0, 2, 3, 1)).reshape(c_out, 9 * c_in),
        'c1sc': c1sc[:, None],
        'c1sh': (c1sc * raw['c1b'] + c1sh)[:, None],
        'c2w': jnp.transpose(raw['c2w'], (0, 2, 3, 1)).reshape(c_out, 9 * c_out),
        'c2sc': c2sc[:, None],
        'c2sh': (c2sc * raw['c2b'] + c2sh)[:, None],
    }
    return fold, raw


# ---------------------------------------------------------------------------
# Full UpAtt forward (NCHW in / NCHW out, like the PyTorch module)
# ---------------------------------------------------------------------------
def up_att_forward(x1_nchw, x2_nchw, fold):
    B, c_in, H, W = x1_nchw.shape
    _, c_out, H2, W2 = x2_nchw.shape
    c_half = c_in // 2
    assert H2 == 2 * H and W2 == 2 * W and c_out + c_half == c_in
    S1, S2 = H * W, H2 * W2
    bf = jnp.bfloat16

    # 2-D bilinear operator (transposed for right multiplication); bf16 MXU operand.
    ut = jnp.kron(_interp_matrix(H, H2), _interp_matrix(W, W2)).T.astype(bf)  # (S1, S2)
    mask9 = _border_masks(H2, W2)                                             # (9, S2)

    # Free reshapes: NCHW stays NCHW, spatial flattened onto the lane dim.
    x1f = x1_nchw.reshape(B, c_in, S1)
    x2f = x2_nchw.reshape(B, c_out, S2)

    weights = [
        fold['preW'].astype(bf), fold['b_pre'],
        fold['wx'].astype(bf), fold['bx'], fold['wp'], fold['bp'],
        fold['c1w'].astype(bf), fold['c1sc'], fold['c1sh'],
        fold['c2w'].astype(bf), fold['c2sc'], fold['c2sh'],
    ]

    def inv(a):  # grid-invariant operand (same block every step)
        nd = a.ndim
        return pl.BlockSpec(a.shape, lambda b: (0,) * nd)

    out = pl.pallas_call(
        functools.partial(_upatt_kernel, w2=W2, c_half=c_half),
        out_shape=jax.ShapeDtypeStruct((B, c_out, S2), jnp.float32),
        grid=(B,),  # >= 2 parallel steps keeps both v7x TensorCores busy
        in_specs=[pl.BlockSpec((1, c_in, S1), lambda b: (b, 0, 0)),
                  pl.BlockSpec((1, c_out, S2), lambda b: (b, 0, 0)),
                  inv(ut), inv(mask9)] + [inv(wt) for wt in weights],
        out_specs=pl.BlockSpec((1, c_out, S2), lambda b: (b, 0, 0)),
        compiler_params=pltpu.CompilerParams(
            dimension_semantics=("parallel",),
            vmem_limit_bytes=32 * 1024 * 1024),
    )(x1f, x2f, ut, mask9, *weights)

    return out.reshape(B, c_out, H2, W2)


# ---------------------------------------------------------------------------
# Unfused pure-JAX f32 reference (inference-mode BN) for a structural check
# ---------------------------------------------------------------------------
def up_att_reference(x1, x2, raw):
    B, c_in, H, W = x1.shape
    H2, W2 = 2 * H, 2 * W

    def bn(x, p):
        g, b, m, v = p
        s = g * jax.lax.rsqrt(v + EPS)
        return (x - m[None, :, None, None]) * s[None, :, None, None] \
            + b[None, :, None, None]

    def c1x1(x, w, b):
        return jnp.einsum('oc,bchw->bohw', w, x) + b[None, :, None, None]

    def c3x3(x, w, b):
        y = jax.lax.conv_general_dilated(
            x, w, window_strides=(1, 1), padding='SAME',
            dimension_numbers=('NCHW', 'OIHW', 'NCHW'))
        return y + b[None, :, None, None]

    ah = _interp_matrix(H, H2)
    aw = _interp_matrix(W, W2)
    up = jnp.einsum('ph,qw,bchw->bcpq', ah, aw, x1)

    x1r = c1x1(up, raw['wr'], raw['br'])
    g1 = bn(c1x1(x1r, raw['wg'], raw['bg']), raw['bn_g'])
    xa = bn(c1x1(x2, raw['wx'], raw['bx']), raw['bn_x'])
    psi = jax.nn.sigmoid(bn(c1x1(jax.nn.relu(g1 + xa), raw['wp'], raw['bp']),
                            raw['bn_p']))
    cat = jnp.concatenate([x2 * psi, x1r], axis=1)
    h = jax.nn.relu(bn(c3x3(cat, raw['c1w'], raw['c1b']), raw['bn_1']))
    h = jax.nn.relu(bn(c3x3(h, raw['c2w'], raw['c2b']), raw['bn_2']))
    return h


if __name__ == "__main__":
    key = jax.random.PRNGKey(0)
    k1, k2, kp = jax.random.split(key, 3)

    B = 2
    C_in, C_out = 16, 8          # UpAtt(in_channels=16, out_channels=8, bilinear=True)
    H, W = 8, 8                  # decoder spatial; encoder skip is 16x16

    x1 = jax.random.normal(k1, (B, C_in, H, W), jnp.float32)             # decoder feature
    x2 = jax.random.normal(k2, (B, C_out, 2 * H, 2 * W), jnp.float32)    # skip connection

    fold, raw = init_params(kp, C_in, C_out)

    out = jax.jit(up_att_forward)(x1, x2, fold)
    out = jax.block_until_ready(out)
    assert out.shape == (B, C_out, 2 * H, 2 * W), out.shape
    assert bool(jnp.all(jnp.isfinite(out)))

    # Loose structural sanity check: bf16 MXU operands give small drift (<<1),
    # while any structural bug (roll direction, tap/concat order) is O(1)+.
    ref = up_att_reference(x1, x2, raw)
    max_err = float(jnp.max(jnp.abs(out - ref)))
    assert max_err < 1.0, max_err

    print("KERNEL_OK")
</pallas_src>

<mosaic_0001>
module attributes {stable_mosaic.version = 11 : i64} {
  func.func private @main(%arg0: i32) attributes {dimension_semantics = [#tpu.dimension_semantics<core_parallel>], iteration_bounds = array<i64: 2>, tpu.core_type = #tpu.core_type<sc_scalar_subcore>, window_params = []} {
    return
  }
}

module attributes {stable_mosaic.version = 11 : i64} {
  func.func private @main(%arg0: i32) attributes {dimension_semantics = [#tpu.dimension_semantics<core_parallel>], iteration_bounds = array<i64: 2>, tpu.core_type = #tpu.core_type<sc_scalar_subcore>, window_params = []} {
    return
  }
}

module attributes {stable_mosaic.version = 11 : i64} {
  func.func @_upatt_kernel(%arg0: i32, %arg1: memref<1x16x64xf32, #tpu.memory_space<vmem>>, %arg2: memref<1x8x256xf32, #tpu.memory_space<vmem>>, %arg3: memref<64x256xbf16, #tpu.memory_space<vmem>>, %arg4: memref<9x256xf32, #tpu.memory_space<vmem>>, %arg5: memref<12x16xbf16, #tpu.memory_space<vmem>>, %arg6: memref<12x1xf32, #tpu.memory_space<vmem>>, %arg7: memref<4x8xbf16, #tpu.memory_space<vmem>>, %arg8: memref<4x1xf32, #tpu.memory_space<vmem>>, %arg9: memref<4x1xf32, #tpu.memory_space<vmem>>, %arg10: memref<1x1xf32, #tpu.memory_space<vmem>>, %arg11: memref<8x144xbf16, #tpu.memory_space<vmem>>, %arg12: memref<8x1xf32, #tpu.memory_space<vmem>>, %arg13: memref<8x1xf32, #tpu.memory_space<vmem>>, %arg14: memref<8x72xbf16, #tpu.memory_space<vmem>>, %arg15: memref<8x1xf32, #tpu.memory_space<vmem>>, %arg16: memref<8x1xf32, #tpu.memory_space<vmem>>, %arg17: memref<1x8x256xf32, #tpu.memory_space<vmem>>) attributes {dimension_semantics = [#tpu.dimension_semantics<parallel>], iteration_bounds = array<i64: 2>, scalar_prefetch = 0 : i64, scratch_operands = 0 : i64, tpu.core_type = #tpu.core_type<tc>, window_params = [{transform_indices = @transform_0, window_bounds = array<i64: 1, 16, 64>}, {transform_indices = @transform_1, window_bounds = array<i64: 1, 8, 256>}, {pipeline_mode = #tpu.pipeline_mode<synchronous>, transform_indices = @transform_2, window_bounds = array<i64: 64, 256>}, {pipeline_mode = #tpu.pipeline_mode<synchronous>, transform_indices = @transform_3, window_bounds = array<i64: 9, 256>}, {pipeline_mode = #tpu.pipeline_mode<synchronous>, transform_indices = @transform_4, window_bounds = array<i64: 12, 16>}, {pipeline_mode = #tpu.pipeline_mode<synchronous>, transform_indices = @transform_5, window_bounds = array<i64: 12, 1>}, {pipeline_mode = #tpu.pipeline_mode<synchronous>, transform_indices = @transform_6, window_bounds = array<i64: 4, 8>}, {pipeline_mode = #tpu.pipeline_mode<synchronous>, transform_indices = @transform_7, window_bounds = array<i64: 4, 1>}, {pipeline_mode = #tpu.pipeline_mode<synchronous>, transform_indices = @transform_8, window_bounds = array<i64: 4, 1>}, {pipeline_mode = #tpu.pipeline_mode<synchronous>, transform_indices = @transform_9, window_bounds = array<i64: 1, 1>}, {pipeline_mode = #tpu.pipeline_mode<synchronous>, transform_indices = @transform_10, window_bounds = array<i64: 8, 144>}, {pipeline_mode = #tpu.pipeline_mode<synchronous>, transform_indices = @transform_11, window_bounds = array<i64: 8, 1>}, {pipeline_mode = #tpu.pipeline_mode<synchronous>, transform_indices = @transform_12, window_bounds = array<i64: 8, 1>}, {pipeline_mode = #tpu.pipeline_mode<synchronous>, transform_indices = @transform_13, window_bounds = array<i64: 8, 72>}, {pipeline_mode = #tpu.pipeline_mode<synchronous>, transform_indices = @transform_14, window_bounds = array<i64: 8, 1>}, {pipeline_mode = #tpu.pipeline_mode<synchronous>, transform_indices = @transform_15, window_bounds = array<i64: 8, 1>}, {transform_indices = @transform_16, window_bounds = array<i64: 1, 8, 256>}]} {
    %c0 = arith.constant 0 : index
    %c0_0 = arith.constant 0 : index
    %c0_1 = arith.constant 0 : index
    %0 = vector.load %arg1[%c0, %c0_0, %c0_1] : memref<1x16x64xf32, #tpu.memory_space<vmem>>, vector<1x16x64xf32>
    %1 = vector.shape_cast %0 : vector<1x16x64xf32> to vector<16x64xf32>
    %2 = arith.truncf %1 : vector<16x64xf32> to vector<16x64xbf16>
    %c0_2 = arith.constant 0 : index
    %c0_3 = arith.constant 0 : index
    %c0_4 = arith.constant 0 : index
    %3 = vector.load %arg2[%c0_2, %c0_3, %c0_4] : memref<1x8x256xf32, #tpu.memory_space<vmem>>, vector<1x8x256xf32>
    %4 = vector.shape_cast %3 : vector<1x8x256xf32> to vector<8x256xf32>
    %c0_5 = arith.constant 0 : index
    %c0_6 = arith.constant 0 : index
    %5 = vector.load %arg4[%c0_5, %c0_6] : memref<9x256xf32, #tpu.memory_space<vmem>>, vector<9x256xf32>
    %c0_7 = arith.constant 0 : index
    %c0_8 = arith.constant 0 : index
    %6 = vector.load %arg5[%c0_7, %c0_8] : memref<12x16xbf16, #tpu.memory_space<vmem>>, vector<12x16xbf16>
    %cst = arith.constant dense<0.000000e+00> : vector<12x64xf32>
    %7 = tpu.matmul %6, %2, %cst {dimension_numbers = #tpu.dot_dimension_numbers<[1], [0], [0], [1], [0, 0, 1, 1], [], []>} : vector<12x16xbf16>, vector<16x64xbf16>, vector<12x64xf32> -> vector<12x64xf32>
    %8 = arith.truncf %7 : vector<12x64xf32> to vector<12x64xbf16>
    %c0_9 = arith.constant 0 : index
    %c0_10 = arith.constant 0 : index
    %9 = vector.load %arg3[%c0_9, %c0_10] : memref<64x256xbf16, #tpu.memory_space<vmem>>, vector<64x256xbf16>
    %cst_11 = arith.constant dense<0.000000e+00> : vector<12x256xf32>
    %10 = tpu.matmul %8, %9, %cst_11 {dimension_numbers = #tpu.dot_dimension_numbers<[1], [0], [0], [1], [0, 0, 1, 1], [], []>} : vector<12x64xbf16>, vector<64x256xbf16>, vector<12x256xf32> -> vector<12x256xf32>
    %c0_12 = arith.constant 0 : index
    %c0_13 = arith.constant 0 : index
    %11 = vector.load %arg6[%c0_12, %c0_13] : memref<12x1xf32, #tpu.memory_space<vmem>>, vector<12x1xf32>
    %12 = vector.broadcast %11 : vector<12x1xf32> to vector<12x256xf32>
    %13 = arith.addf %10, %12 : vector<12x256xf32>
    %14 = vector.extract_strided_slice %13 {offsets = [0, 0], sizes = [8, 256], strides = [1, 1]} : vector<12x256xf32> to vector<8x256xf32>
    %15 = vector.extract_strided_slice %13 {offsets = [8, 0], sizes = [4, 256], strides = [1, 1]} : vector<12x256xf32> to vector<4x256xf32>
    %c0_14 = arith.constant 0 : index
    %c0_15 = arith.constant 0 : index
    %16 = vector.load %arg7[%c0_14, %c0_15] : memref<4x8xbf16, #tpu.memory_space<vmem>>, vector<4x8xbf16>
    %17 = arith.truncf %4 : vector<8x256xf32> to vector<8x256xbf16>
    %cst_16 = arith.constant dense<0.000000e+00> : vector<4x256xf32>
    %18 = tpu.matmul %16, %17, %cst_16 {dimension_numbers = #tpu.dot_dimension_numbers<[1], [0], [0], [1], [0, 0, 1, 1], [], []>} : vector<4x8xbf16>, vector<8x256xbf16>, vector<4x256xf32> -> vector<4x256xf32>
    %c0_17 = arith.constant 0 : index
    %c0_18 = arith.constant 0 : index
    %19 = vector.load %arg8[%c0_17, %c0_18] : memref<4x1xf32, #tpu.memory_space<vmem>>, vector<4x1xf32>
    %20 = vector.broadcast %19 : vector<4x1xf32> to vector<4x256xf32>
    %21 = arith.addf %18, %20 : vector<4x256xf32>
    %22 = arith.addf %15, %21 : vector<4x256xf32>
    %cst_19 = arith.constant 0.000000e+00 : f32
    %23 = vector.broadcast %cst_19 : f32 to vector<4x256xf32>
    %24 = arith.maximumf %22, %23 : vector<4x256xf32>
    %c0_20 = arith.constant 0 : index
    %c0_21 = arith.constant 0 : index
    %25 = vector.load %arg9[%c0_20, %c0_21] : memref<4x1xf32, #tpu.memory_space<vmem>>, vector<4x1xf32>
    %26 = vector.broadcast %25 : vector<4x1xf32> to vector<4x256xf32>
    %27 = arith.mulf %24, %26 : vector<4x256xf32>
    %cst_22 = arith.constant dense<0.000000e+00> : vector<256xf32>
    %28 = vector.multi_reduction <add>, %27, %cst_22 [0] : vector<4x256xf32> to vector<256xf32>
    %29 = vector.shape_cast %28 : vector<256xf32> to vector<1x256xf32>
    %c0_23 = arith.constant 0 : index
    %c0_24 = arith.constant 0 : index
    %30 = vector.load %arg10[%c0_23, %c0_24] : memref<1x1xf32, #tpu.memory_space<vmem>>, vector<1x1xf32>
    %31 = vector.broadcast %30 : vector<1x1xf32> to vector<1x256xf32>
    %32 = arith.addf %29, %31 : vector<1x256xf32>
    %33 = arith.negf %32 : vector<1x256xf32>
    %34 = math.exp %33 : vector<1x256xf32>
    %cst_25 = arith.constant 1.000000e+00 : f32
    %35 = vector.broadcast %cst_25 : f32 to vector<1x256xf32>
    %36 = arith.addf %35, %34 : vector<1x256xf32>
    %37 = arith.divf %35, %36 : vector<1x256xf32>
    %38 = vector.broadcast %37 : vector<1x256xf32> to vector<8x256xf32>
    %39 = arith.mulf %4, %38 : vector<8x256xf32>
    %40 = tpu.concatenate %39, %14 in 0 : vector<8x256xf32>, vector<8x256xf32> -> vector<16x256xf32>
    %c0_26 = arith.constant 0 : index
    %c0_27 = arith.constant 0 : index
    %41 = vector.load %arg11[%c0_26, %c0_27] : memref<8x144xbf16, #tpu.memory_space<vmem>>, vector<8x144xbf16>
    %c0_28 = arith.constant 0 : index
    %c0_29 = arith.constant 0 : index
    %42 = vector.load %arg12[%c0_28, %c0_29] : memref<8x1xf32, #tpu.memory_space<vmem>>, vector<8x1xf32>
    %c0_30 = arith.constant 0 : index
    %c0_31 = arith.constant 0 : index
    %43 = vector.load %arg13[%c0_30, %c0_31] : memref<8x1xf32, #tpu.memory_space<vmem>>, vector<8x1xf32>
    %c17_i32 = arith.constant 17 : i32
    %44 = tpu.dynamic_rotate %40 by %c17_i32 dim 1 : vector<16x256xf32>, i32 -> vector<16x256xf32>
    %45 = vector.extract_strided_slice %5 {offsets = [0, 0], sizes = [1, 256], strides = [1, 1]} : vector<9x256xf32> to vector<1x256xf32>
    %46 = vector.broadcast %45 : vector<1x256xf32> to vector<16x256xf32>
    %47 = arith.mulf %44, %46 : vector<16x256xf32>
    %c16_i32 = arith.constant 16 : i32
    %48 = tpu.dynamic_rotate %40 by %c16_i32 dim 1 : vector<16x256xf32>, i32 -> vector<16x256xf32>
    %49 = vector.extract_strided_slice %5 {offsets = [1, 0], sizes = [1, 256], strides = [1, 1]} : vector<9x256xf32> to vector<1x256xf32>
    %50 = vector.broadcast %49 : vector<1x256xf32> to vector<16x256xf32>
    %51 = arith.mulf %48, %50 : vector<16x256xf32>
    %c15_i32 = arith.constant 15 : i32
    %52 = tpu.dynamic_rotate %40 by %c15_i32 dim 1 : vector<16x256xf32>, i32 -> vector<16x256xf32>
    %53 = vector.extract_strided_slice %5 {offsets = [2, 0], sizes = [1, 256], strides = [1, 1]} : vector<9x256xf32> to vector<1x256xf32>
    %54 = vector.broadcast %53 : vector<1x256xf32> to vector<16x256xf32>
    %55 = arith.mulf %52, %54 : vector<16x256xf32>
    %c1_i32 = arith.constant 1 : i32
    %56 = tpu.dynamic_rotate %40 by %c1_i32 dim 1 : vector<16x256xf32>, i32 -> vector<16x256xf32>
    %57 = vector.extract_strided_slice %5 {offsets = [3, 0], sizes = [1, 256], strides = [1, 1]} : vector<9x256xf32> to vector<1x256xf32>
    %58 = vector.broadcast %57 : vector<1x256xf32> to vector<16x256xf32>
    %59 = arith.mulf %56, %58 : vector<16x256xf32>
    %c255_i32 = arith.constant 255 : i32
    %60 = tpu.dynamic_rotate %40 by %c255_i32 dim 1 : vector<16x256xf32>, i32 -> vector<16x256xf32>
    %61 = vector.extract_strided_slice %5 {offsets = [5, 0], sizes = [1, 256], strides = [1, 1]} : vector<9x256xf32> to vector<1x256xf32>
    %62 = vector.broadcast %61 : vector<1x256xf32> to vector<16x256xf32>
    %63 = arith.mulf %60, %62 : vector<16x256xf32>
    %c241_i32 = arith.constant 241 : i32
    %64 = tpu.dynamic_rotate %40 by %c241_i32 dim 1 : vector<16x256xf32>, i32 -> vector<16x256xf32>
    %65 = vector.extract_strided_slice %5 {offsets = [6, 0], sizes = [1, 256], strides = [1, 1]} : vector<9x256xf32> to vector<1x256xf32>
    %66 = vector.broadcast %65 : vector<1x256xf32> to vector<16x256xf32>
    %67 = arith.mulf %64, %66 : vector<16x256xf32>
    %c240_i32 = arith.constant 240 : i32
    %68 = tpu.dynamic_rotate %40 by %c240_i32 dim 1 : vector<16x256xf32>, i32 -> vector<16x256xf32>
    %69 = vector.extract_strided_slice %5 {offsets = [7, 0], sizes = [1, 256], strides = [1, 1]} : vector<9x256xf32> to vector<1x256xf32>
    %70 = vector.broadcast %69 : vector<1x256xf32> to vector<16x256xf32>
    %71 = arith.mulf %68, %70 : vector<16x256xf32>
    %c239_i32 = arith.constant 239 : i32
    %72 = tpu.dynamic_rotate %40 by %c239_i32 dim 1 : vector<16x256xf32>, i32 -> vector<16x256xf32>
    %73 = vector.extract_strided_slice %5 {offsets = [8, 0], sizes = [1, 256], strides = [1, 1]} : vector<9x256xf32> to vector<1x256xf32>
    %74 = vector.broadcast %73 : vector<1x256xf32> to vector<16x256xf32>
    %75 = arith.mulf %72, %74 : vector<16x256xf32>
    %76 = tpu.concatenate %47, %51, %55, %59, %40, %63, %67, %71, %75 in 0 : vector<16x256xf32>, vector<16x256xf32>, vector<16x256xf32>, vector<16x256xf32>, vector<16x256xf32>, vector<16x256xf32>, vector<16x256xf32>, vector<16x256xf32>, vector<16x256xf32> -> vector<144x256xf32>
    %77 = arith.truncf %76 : vector<144x256xf32> to vector<144x256xbf16>
    %cst_32 = arith.constant dense<0.000000e+00> : vector<8x256xf32>
    %78 = tpu.matmul %41, %77, %cst_32 {dimension_numbers = #tpu.dot_dimension_numbers<[1], [0], [0], [1], [0, 0, 1, 1], [], []>} : vector<8x144xbf16>, vector<144x256xbf16>, vector<8x256xf32> -> vector<8x256xf32>
    %79 = vector.broadcast %42 : vector<8x1xf32> to vector<8x256xf32>
    %80 = arith.mulf %78, %79 : vector<8x256xf32>
    %81 = vector.broadcast %43 : vector<8x1xf32> to vector<8x256xf32>
    %82 = arith.addf %80, %81 : vector<8x256xf32>
    %cst_33 = arith.constant 0.000000e+00 : f32
    %83 = vector.broadcast %cst_33 : f32 to vector<8x256xf32>
    %84 = arith.maximumf %82, %83 : vector<8x256xf32>
    %c0_34 = arith.constant 0 : index
    %c0_35 = arith.constant 0 : index
    %85 = vector.load %arg14[%c0_34, %c0_35] : memref<8x72xbf16, #tpu.memory_space<vmem>>, vector<8x72xbf16>
    %c0_36 = arith.constant 0 : index
    %c0_37 = arith.constant 0 : index
    %86 = vector.load %arg15[%c0_36, %c0_37] : memref<8x1xf32, #tpu.memory_space<vmem>>, vector<8x1xf32>
    %c0_38 = arith.constant 0 : index
    %c0_39 = arith.constant 0 : index
    %87 = vector.load %arg16[%c0_38, %c0_39] : memref<8x1xf32, #tpu.memory_space<vmem>>, vector<8x1xf32>
    %c17_i32_40 = arith.constant 17 : i32
    %88 = tpu.dynamic_rotate %84 by %c17_i32_40 dim 1 : vector<8x256xf32>, i32 -> vector<8x256xf32>
    %89 = vector.extract_strided_slice %5 {offsets = [0, 0], sizes = [1, 256], strides = [1, 1]} : vector<9x256xf32> to vector<1x256xf32>
    %90 = vector.broadcast %89 : vector<1x256xf32> to vector<8x256xf32>
    %91 = arith.mulf %88, %90 : vector<8x256xf32>
    %c16_i32_41 = arith.constant 16 : i32
    %92 = tpu.dynamic_rotate %84 by %c16_i32_41 dim 1 : vector<8x256xf32>, i32 -> vector<8x256xf32>
    %93 = vector.extract_strided_slice %5 {offsets = [1, 0], sizes = [1, 256], strides = [1, 1]} : vector<9x256xf32> to vector<1x256xf32>
    %94 = vector.broadcast %93 : vector<1x256xf32> to vector<8x256xf32>
    %95 = arith.mulf %92, %94 : vector<8x256xf32>
    %c15_i32_42 = arith.constant 15 : i32
    %96 = tpu.dynamic_rotate %84 by %c15_i32_42 dim 1 : vector<8x256xf32>, i32 -> vector<8x256xf32>
    %97 = vector.extract_strided_slice %5 {offsets = [2, 0], sizes = [1, 256], strides = [1, 1]} : vector<9x256xf32> to vector<1x256xf32>
    %98 = vector.broadcast %97 : vector<1x256xf32> to vector<8x256xf32>
    %99 = arith.mulf %96, %98 : vector<8x256xf32>
    %c1_i32_43 = arith.constant 1 : i32
    %100 = tpu.dynamic_rotate %84 by %c1_i32_43 dim 1 : vector<8x256xf32>, i32 -> vector<8x256xf32>
    %101 = vector.extract_strided_slice %5 {offsets = [3, 0], sizes = [1, 256], strides = [1, 1]} : vector<9x256xf32> to vector<1x256xf32>
    %102 = vector.broadcast %101 : vector<1x256xf32> to vector<8x256xf32>
    %103 = arith.mulf %100, %102 : vector<8x256xf32>
    %c255_i32_44 = arith.constant 255 : i32
    %104 = tpu.dynamic_rotate %84 by %c255_i32_44 dim 1 : vector<8x256xf32>, i32 -> vector<8x256xf32>
    %105 = vector.extract_strided_slice %5 {offsets = [5, 0], sizes = [1, 256], strides = [1, 1]} : vector<9x256xf32> to vector<1x256xf32>
    %106 = vector.broadcast %105 : vector<1x256xf32> to vector<8x256xf32>
    %107 = arith.mulf %104, %106 : vector<8x256xf32>
    %c241_i32_45 = arith.constant 241 : i32
    %108 = tpu.dynamic_rotate %84 by %c241_i32_45 dim 1 : vector<8x256xf32>, i32 -> vector<8x256xf32>
    %109 = vector.extract_strided_slice %5 {offsets = [6, 0], sizes = [1, 256], strides = [1, 1]} : vector<9x256xf32> to vector<1x256xf32>
    %110 = vector.broadcast %109 : vector<1x256xf32> to vector<8x256xf32>
    %111 = arith.mulf %108, %110 : vector<8x256xf32>
    %c240_i32_46 = arith.constant 240 : i32
    %112 = tpu.dynamic_rotate %84 by %c240_i32_46 dim 1 : vector<8x256xf32>, i32 -> vector<8x256xf32>
    %113 = vector.extract_strided_slice %5 {offsets = [7, 0], sizes = [1, 256], strides = [1, 1]} : vector<9x256xf32> to vector<1x256xf32>
    %114 = vector.broadcast %113 : vector<1x256xf32> to vector<8x256xf32>
    %115 = arith.mulf %112, %114 : vector<8x256xf32>
    %c239_i32_47 = arith.constant 239 : i32
    %116 = tpu.dynamic_rotate %84 by %c239_i32_47 dim 1 : vector<8x256xf32>, i32 -> vector<8x256xf32>
    %117 = vector.extract_strided_slice %5 {offsets = [8, 0], sizes = [1, 256], strides = [1, 1]} : vector<9x256xf32> to vector<1x256xf32>
    %118 = vector.broadcast %117 : vector<1x256xf32> to vector<8x256xf32>
    %119 = arith.mulf %116, %118 : vector<8x256xf32>
    %120 = tpu.concatenate %91, %95, %99, %103, %84, %107, %111, %115, %119 in 0 : vector<8x256xf32>, vector<8x256xf32>, vector<8x256xf32>, vector<8x256xf32>, vector<8x256xf32>, vector<8x256xf32>, vector<8x256xf32>, vector<8x256xf32>, vector<8x256xf32> -> vector<72x256xf32>
    %121 = arith.truncf %120 : vector<72x256xf32> to vector<72x256xbf16>
    %cst_48 = arith.constant dense<0.000000e+00> : vector<8x256xf32>
    %122 = tpu.matmul %85, %121, %cst_48 {dimension_numbers = #tpu.dot_dimension_numbers<[1], [0], [0], [1], [0, 0, 1, 1], [], []>} : vector<8x72xbf16>, vector<72x256xbf16>, vector<8x256xf32> -> vector<8x256xf32>
    %123 = vector.broadcast %86 : vector<8x1xf32> to vector<8x256xf32>
    %124 = arith.mulf %122, %123 : vector<8x256xf32>
    %125 = vector.broadcast %87 : vector<8x1xf32> to vector<8x256xf32>
    %126 = arith.addf %124, %125 : vector<8x256xf32>
    %cst_49 = arith.constant 0.000000e+00 : f32
    %127 = vector.broadcast %cst_49 : f32 to vector<8x256xf32>
    %128 = arith.maximumf %126, %127 : vector<8x256xf32>
    %c0_50 = arith.constant 0 : index
    %c0_51 = arith.constant 0 : index
    %c0_52 = arith.constant 0 : index
    %129 = vector.load %arg17[%c0_50, %c0_51, %c0_52] : memref<1x8x256xf32, #tpu.memory_space<vmem>>, vector<1x8x256xf32>
    %130 = vector.shape_cast %129 : vector<1x8x256xf32> to vector<8x256xf32>
    %131 = vector.shape_cast %128 : vector<8x256xf32> to vector<1x8x256xf32>
    tpu.vector_store %arg17[%c0_50, %c0_51, %c0_52], %131 {strides = array<i32>} : memref<1x8x256xf32, #tpu.memory_space<vmem>>, vector<1x8x256xf32>,
    return
  }
  func.func @transform_0(%arg0: i32) -> (i32, i32, i32) {
    %c0_i32 = arith.constant 0 : i32
    %c0_i32_0 = arith.constant 0 : i32
    %c0_i32_1 = arith.constant 0 : i32
    return %arg0, %c0_i32, %c0_i32_0 : i32, i32, i32
  }
  func.func @transform_1(%arg0: i32) -> (i32, i32, i32) {
    %c0_i32 = arith.constant 0 : i32
    %c0_i32_0 = arith.constant 0 : i32
    %c0_i32_1 = arith.constant 0 : i32
    return %arg0, %c0_i32, %c0_i32_0 : i32, i32, i32
  }
  func.func @transform_2(%arg0: i32) -> (i32, i32) {
    %c0_i32 = arith.constant 0 : i32
    %c0_i32_0 = arith.constant 0 : i32
    %c0_i32_1 = arith.constant 0 : i32
    return %c0_i32, %c0_i32_0 : i32, i32
  }
  func.func @transform_3(%arg0: i32) -> (i32, i32) {
    %c0_i32 = arith.constant 0 : i32
    %c0_i32_0 = arith.constant 0 : i32
    %c0_i32_1 = arith.constant 0 : i32
    return %c0_i32, %c0_i32_0 : i32, i32
  }
  func.func @transform_4(%arg0: i32) -> (i32, i32) {
    %c0_i32 = arith.constant 0 : i32
    %c0_i32_0 = arith.constant 0 : i32
    %c0_i32_1 = arith.constant 0 : i32
    return %c0_i32, %c0_i32_0 : i32, i32
  }
  func.func @transform_5(%arg0: i32) -> (i32, i32) {
    %c0_i32 = arith.constant 0 : i32
    %c0_i32_0 = arith.constant 0 : i32
    %c0_i32_1 = arith.constant 0 : i32
    return %c0_i32, %c0_i32_0 : i32, i32
  }
  func.func @transform_6(%arg0: i32) -> (i32, i32) {
    %c0_i32 = arith.constant 0 : i32
    %c0_i32_0 = arith.constant 0 : i32
    %c0_i32_1 = arith.constant 0 : i32
    return %c0_i32, %c0_i32_0 : i32, i32
  }
  func.func @transform_7(%arg0: i32) -> (i32, i32) {
    %c0_i32 = arith.constant 0 : i32
    %c0_i32_0 = arith.constant 0 : i32
    %c0_i32_1 = arith.constant 0 : i32
    return %c0_i32, %c0_i32_0 : i32, i32
  }
  func.func @transform_8(%arg0: i32) -> (i32, i32) {
    %c0_i32 = arith.constant 0 : i32
    %c0_i32_0 = arith.constant 0 : i32
    %c0_i32_1 = arith.constant 0 : i32
    return %c0_i32, %c0_i32_0 : i32, i32
  }
  func.func @transform_9(%arg0: i32) -> (i32, i32) {
    %c0_i32 = arith.constant 0 : i32
    %c0_i32_0 = arith.constant 0 : i32
    %c0_i32_1 = arith.constant 0 : i32
    return %c0_i32, %c0_i32_0 : i32, i32
  }
  func.func @transform_10(%arg0: i32) -> (i32, i32) {
    %c0_i32 = arith.constant 0 : i32
    %c0_i32_0 = arith.constant 0 : i32
    %c0_i32_1 = arith.constant 0 : i32
    return %c0_i32, %c0_i32_0 : i32, i32
  }
  func.func @transform_11(%arg0: i32) -> (i32, i32) {
    %c0_i32 = arith.constant 0 : i32
    %c0_i32_0 = arith.constant 0 : i32
    %c0_i32_1 = arith.constant 0 : i32
    return %c0_i32, %c0_i32_0 : i32, i32
  }
  func.func @transform_12(%arg0: i32) -> (i32, i32) {
    %c0_i32 = arith.constant 0 : i32
    %c0_i32_0 = arith.constant 0 : i32
    %c0_i32_1 = arith.constant 0 : i32
    return %c0_i32, %c0_i32_0 : i32, i32
  }
  func.func @transform_13(%arg0: i32) -> (i32, i32) {
    %c0_i32 = arith.constant 0 : i32
    %c0_i32_0 = arith.constant 0 : i32
    %c0_i32_1 = arith.constant 0 : i32
    return %c0_i32, %c0_i32_0 : i32, i32
  }
  func.func @transform_14(%arg0: i32) -> (i32, i32) {
    %c0_i32 = arith.constant 0 : i32
    %c0_i32_0 = arith.constant 0 : i32
    %c0_i32_1 = arith.constant 0 : i32
    return %c0_i32, %c0_i32_0 : i32, i32
  }
  func.func @transform_15(%arg0: i32) -> (i32, i32) {
    %c0_i32 = arith.constant 0 : i32
    %c0_i32_0 = arith.constant 0 : i32
    %c0_i32_1 = arith.constant 0 : i32
    return %c0_i32, %c0_i32_0 : i32, i32
  }
  func.func @transform_16(%arg0: i32) -> (i32, i32, i32) {
    %c0_i32 = arith.constant 0 : i32
    %c0_i32_0 = arith.constant 0 : i32
    %c0_i32_1 = arith.constant 0 : i32
    return %arg0, %c0_i32, %c0_i32_0 : i32, i32, i32
  }
}

</mosaic_0001>

<llo_original>
// kernel: up_att_forward.1
$region0: #{up_att_forward.1}
  #allocation0 [shape = 'u32[]', space=smem, size = 0x4, offset = 0x4, fixed_abs, tag = 'smem constant byte address 0x4 - core index']
  #allocation1 [shape = 'u32[144,128]{1,0:T(1,128)}', space=vmem, size = 0x12000, scoped, tag = 'internal scratch']
  #allocation2 [shape = 'f32[1,1]{1,0:T(1,128)S(1)}', space=vmem, size = 0x200, scoped, tag = 'scoped memory for up_att_forward.1']
  %s0 = inlined_call_operand.vmem [shape: f32[2,16,64], index: 0, kind: input, shape index: {}]
  %s1 = inlined_call_operand.vmem [shape: f32[2,8,256], index: 1, kind: input, shape index: {}]
  %s2 = inlined_call_operand.vmem [shape: bf16[64,256], index: 2, kind: input, shape index: {}]
  %s3 = inlined_call_operand.vmem [shape: f32[9,256], index: 3, kind: input, shape index: {}]
  %s4 = inlined_call_operand.vmem [shape: bf16[12,16], index: 4, kind: input, shape index: {}]
  %s5 = inlined_call_operand.vmem [shape: f32[12,1], index: 5, kind: input, shape index: {}]
  %s6 = inlined_call_operand.vmem [shape: bf16[4,8], index: 6, kind: input, shape index: {}]
  %s7 = inlined_call_operand.vmem [shape: f32[4,1], index: 7, kind: input, shape index: {}]
  %s8 = inlined_call_operand.vmem [shape: f32[4,1], index: 8, kind: input, shape index: {}]
  %s9 = inlined_call_operand.<no memory space> [shape: f32[1,1], index: 9, kind: input, shape index: {}]
  %s10 = inlined_call_operand.vmem [shape: bf16[8,144], index: 10, kind: input, shape index: {}]
  %s11 = inlined_call_operand.vmem [shape: f32[8,1], index: 11, kind: input, shape index: {}]
  %s12 = inlined_call_operand.vmem [shape: f32[8,1], index: 12, kind: input, shape index: {}]
  %s13 = inlined_call_operand.vmem [shape: bf16[8,72], index: 13, kind: input, shape index: {}]
  %s14 = inlined_call_operand.vmem [shape: f32[8,1], index: 14, kind: input, shape index: {}]
  %s15 = inlined_call_operand.vmem [shape: f32[8,1], index: 15, kind: input, shape index: {}]
  %s16 = inlined_call_operand.vmem [shape: f32[2,8,256], index: 16, kind: output, shape index: {}]
  %s17 = sld [smem:[#allocation0]]
  $region97: #{up_att_forward.1} parent=0
    _
  %s19 = ssub.s32 1, %s17
  %s20 = scalar_select 0, %s19, %s17
  %v21 = vstv %s9
  %22 = vst [vmem:[#allocation2] sm:$0x1] %v21
  loop: start=0, step=1, limit=4
  $region2: #{up_att_forward.1} parent=0 // loop_pre_header
    _
  $region3: #{up_att_forward.1} parent=0 // loop_header
    %s24 = sphi 0, %s28
    %p25 = scmp.ge.s32.totalorder %s24, 4
    %s34 = sphi 0, %s36
    %s37 = sphi 0, %s34
    %s38 = sphi 0, %s37
    %s54 = sphi 0, %s38
    %s60 = sphi 0, %s62
    %s63 = sphi 0, %s60
    %s64 = sphi 0, %s63
    %s80 = sphi 0, %s64
    %s84 = sphi 0, %s84
    %s86 = sphi 0, %s84
    %s87 = sphi 0, %s86
    %s101 = sphi 0, %s87
    %s105 = sphi 0, %s105
    %s107 = sphi 0, %s105
    %s108 = sphi 0, %s107
    %s122 = sphi 0, %s108
    %s126 = sphi 0, %s126
    %s128 = sphi 0, %s126
    %s129 = sphi 0, %s128
    %s143 = sphi 0, %s129
    %s147 = sphi 0, %s147
    %s149 = sphi 0, %s147
    %s150 = sphi 0, %s149
    %s164 = sphi 0, %s150
    %s168 = sphi 0, %s168
    %s170 = sphi 0, %s168
    %s171 = sphi 0, %s170
    %s185 = sphi 0, %s171
    %s189 = sphi 0, %s189
    %s191 = sphi 0, %s189
    %s192 = sphi 0, %s191
    %s206 = sphi 0, %s192
    %s210 = sphi 0, %s210
    %s212 = sphi 0, %s210
    %s213 = sphi 0, %s212
    %s227 = sphi 0, %s213
    %s231 = sphi 0, %s231
    %s233 = sphi 0, %s231
    %s234 = sphi 0, %s233
    %s248 = sphi 0, %s234
    %s252 = sphi 0, %s252
    %s254 = sphi 0, %s252
    %s255 = sphi 0, %s254
    %s269 = sphi 0, %s255
    %s273 = sphi 0, %s273
    %s275 = sphi 0, %s273
    %s276 = sphi 0, %s275
    %s290 = sphi 0, %s276
    %s294 = sphi 0, %s294
    %s296 = sphi 0, %s294
    %s297 = sphi 0, %s296
    %s311 = sphi 0, %s297
    %s315 = sphi 0, %s315
    %s317 = sphi 0, %s315
    %s318 = sphi 0, %s317
    %s332 = sphi 0, %s318
    %s336 = sphi 0, %s336
    %s338 = sphi 0, %s336
    %s339 = sphi 0, %s338
    %s353 = sphi 0, %s339
    %s357 = sphi 0, %s357
    %s359 = sphi 0, %s357
    %s360 = sphi 0, %s359
    %s374 = sphi 0, %s360
    %s380 = sphi 0, %s382
    %s383 = sphi 0, %s380
    %s384 = sphi 0, %s383
    %s400 = sphi 0, %s384
  $region4: #{up_att_forward.1} parent=0 // loop_header_branch
    %27 = sbr.rel (%p25) target = $region8
  $region5: #{up_att_forward.1} parent=0 // loop_body
    %s29 = ssub.s32 %s24, 1
    %s30 = ssub.s32 %s24, 2
    %s31 = sadd.s32 %s24, 1
    %s32 = ssub.s32 %s24, %s31
    %p33 = scmp.eq.s32.totalorder %s32, 0
    %s35 = sadd.s32 %s34, 1
    %s36 = scalar_select %p33, %s34, %s35
    %p39 = pneg %p33
    %p40 = scmp.eq.s32.totalorder %s24, 1
    %p41 = por %p39, %p40
    %p42 = scmp.ne.s32.totalorder %s34, %s37
    %p43 = scmp.eq.s32.totalorder %s24, 0
    %p44 = por %p42, %p43
    %p45 = scmp.ne.s32.totalorder %s34, %s37
    %p46 = scmp.eq.s32.totalorder %s29, 1
    %p47 = por %p45, %p46
    %p48 = scmp.ne.s32.totalorder %s37, %s38
    %p49 = scmp.eq.s32.totalorder %s29, 0
    %p50 = por %p48, %p49
    %p51 = scmp.ne.s32.totalorder %s37, %s38
    %p52 = scmp.eq.s32.totalorder %s30, 1
    %p53 = por %p51, %p52
    %p55 = scmp.ne.s32.totalorder %s38, %s54
    %p56 = scmp.eq.s32.totalorder %s30, 0
    %p57 = por %p55, %p56
    %s58 = ssub.s32 %s24, %s31
    %p59 = scmp.eq.s32.totalorder %s58, 0
    %s61 = sadd.s32 %s60, 1
    %s62 = scalar_select %p59, %s60, %s61
    %p65 = pneg %p59
    %p66 = scmp.eq.s32.totalorder %s24, 1
    %p67 = por %p65, %p66
    %p68 = scmp.ne.s32.totalorder %s60, %s63
    %p69 = scmp.eq.s32.totalorder %s24, 0
    %p70 = por %p68, %p69
    %p71 = scmp.ne.s32.totalorder %s60, %s63
    %p72 = scmp.eq.s32.totalorder %s29, 1
    %p73 = por %p71, %p72
    %p74 = scmp.ne.s32.totalorder %s63, %s64
    %p75 = scmp.eq.s32.totalorder %s29, 0
    %p76 = por %p74, %p75
    %p77 = scmp.ne.s32.totalorder %s63, %s64
    %p78 = scmp.eq.s32.totalorder %s30, 1
    %p79 = por %p77, %p78
    %p81 = scmp.ne.s32.totalorder %s64, %s80
    %p82 = scmp.eq.s32.totalorder %s30, 0
    %p83 = por %p81, %p82
    %s85 = sadd.s32 %s84, 1
    %p88 = scmp.eq.s32.totalorder %s24, 1
    %p89 = scmp.ne.s32.totalorder %s84, %s86
    %p90 = scmp.eq.s32.totalorder %s24, 0
    %p91 = por %p89, %p90
    %p92 = scmp.ne.s32.totalorder %s84, %s86
    %p93 = scmp.eq.s32.totalorder %s29, 1
    %p94 = por %p92, %p93
    %p95 = scmp.ne.s32.totalorder %s86, %s87
    %p96 = scmp.eq.s32.totalorder %s29, 0
    %p97 = por %p95, %p96
    %p98 = scmp.ne.s32.totalorder %s86, %s87
    %p99 = scmp.eq.s32.totalorder %s30, 1
    %p100 = por %p98, %p99
    %p102 = scmp.ne.s32.totalorder %s87, %s101
    %p103 = scmp.eq.s32.totalorder %s30, 0
    %p104 = por %p102, %p103
    %s106 = sadd.s32 %s105, 1
    %p109 = scmp.eq.s32.totalorder %s24, 1
    %p110 = scmp.ne.s32.totalorder %s105, %s107
    %p111 = scmp.eq.s32.totalorder %s24, 0
    %p112 = por %p110, %p111
    %p113 = scmp.ne.s32.totalorder %s105, %s107
    %p114 = scmp.eq.s32.totalorder %s29, 1
    %p115 = por %p113, %p114
    %p116 = scmp.ne.s32.totalorder %s107, %s108
    %p117 = scmp.eq.s32.totalorder %s29, 0
    %p118 = por %p116, %p117
    %p119 = scmp.ne.s32.totalorder %s107, %s108
    %p120 = scmp.eq.s32.totalorder %s30, 1
    %p121 = por %p119, %p120
    %p123 = scmp.ne.s32.totalorder %s108, %s122
    %p124 = scmp.eq.s32.totalorder %s30, 0
    %p125 = por %p123, %p124
    %s127 = sadd.s32 %s126, 1
    %p130 = scmp.eq.s32.totalorder %s24, 1
    %p131 = scmp.ne.s32.totalorder %s126, %s128
    %p132 = scmp.eq.s32.totalorder %s24, 0
    %p133 = por %p131, %p132
    %p134 = scmp.ne.s32.totalorder %s126, %s128
    %p135 = scmp.eq.s32.totalorder %s29, 1
    %p136 = por %p134, %p135
    %p137 = scmp.ne.s32.totalorder %s128, %s129
    %p138 = scmp.eq.s32.totalorder %s29, 0
    %p139 = por %p137, %p138
    %p140 = scmp.ne.s32.totalorder %s128, %s129
    %p141 = scmp.eq.s32.totalorder %s30, 1
    %p142 = por %p140, %p141
    %p144 = scmp.ne.s32.totalorder %s129, %s143
    %p145 = scmp.eq.s32.totalorder %s30, 0
    %p146 = por %p144, %p145
    %s148 = sadd.s32 %s147, 1
    %p151 = scmp.eq.s32.totalorder %s24, 1
    %p152 = scmp.ne.s32.totalorder %s147, %s149
    %p153 = scmp.eq.s32.totalorder %s24, 0
    %p154 = por %p152, %p153
    %p155 = scmp.ne.s32.totalorder %s147, %s149
    %p156 = scmp.eq.s32.totalorder %s29, 1
    %p157 = por %p155, %p156
    %p158 = scmp.ne.s32.totalorder %s149, %s150
    %p159 = scmp.eq.s32.totalorder %s29, 0
    %p160 = por %p158, %p159
    %p161 = scmp.ne.s32.totalorder %s149, %s150
    %p162 = scmp.eq.s32.totalorder %s30, 1
    %p163 = por %p161, %p162
    %p165 = scmp.ne.s32.totalorder %s150, %s164
    %p166 = scmp.eq.s32.totalorder %s30, 0
    %p167 = por %p165, %p166
    %s169 = sadd.s32 %s168, 1
    %p172 = scmp.eq.s32.totalorder %s24, 1
    %p173 = scmp.ne.s32.totalorder %s168, %s170
    %p174 = scmp.eq.s32.totalorder %s24, 0
    %p175 = por %p173, %p174
    %p176 = scmp.ne.s32.totalorder %s168, %s170
    %p177 = scmp.eq.s32.totalorder %s29, 1
    %p178 = por %p176, %p177
    %p179 = scmp.ne.s32.totalorder %s170, %s171
    %p180 = scmp.eq.s32.totalorder %s29, 0
    %p181 = por %p179, %p180
    %p182 = scmp.ne.s32.totalorder %s170, %s171
    %p183 = scmp.eq.s32.totalorder %s30, 1
    %p184 = por %p182, %p183
    %p186 = scmp.ne.s32.totalorder %s171, %s185
    %p187 = scmp.eq.s32.totalorder %s30, 0
    %p188 = por %p186, %p187
    %s190 = sadd.s32 %s189, 1
    %p193 = scmp.eq.s32.totalorder %s24, 1
    %p194 = scmp.ne.s32.totalorder %s189, %s191
    %p195 = scmp.eq.s32.totalorder %s24, 0
    %p196 = por %p194, %p195
    %p197 = scmp.ne.s32.totalorder %s189, %s191
    %p198 = scmp.eq.s32.totalorder %s29, 1
    %p199 = por %p197, %p198
    %p200 = scmp.ne.s32.totalorder %s191, %s192
    %p201 = scmp.eq.s32.totalorder %s29, 0
    %p202 = por %p200, %p201
    %p203 = scmp.ne.s32.totalorder %s191, %s192
    %p204 = scmp.eq.s32.totalorder %s30, 1
    %p205 = por %p203, %p204
    %p207 = scmp.ne.s32.totalorder %s192, %s206
    %p208 = scmp.eq.s32.totalorder %s30, 0
    %p209 = por %p207, %p208
    %s211 = sadd.s32 %s210, 1
    %p214 = scmp.eq.s32.totalorder %s24, 1
    %p215 = scmp.ne.s32.totalorder %s210, %s212
    %p216 = scmp.eq.s32.totalorder %s24, 0
    %p217 = por %p215, %p216
    %p218 = scmp.ne.s32.totalorder %s210, %s212
    %p219 = scmp.eq.s32.totalorder %s29, 1
    %p220 = por %p218, %p219
    %p221 = scmp.ne.s32.totalorder %s212, %s213
    %p222 = scmp.eq.s32.totalorder %s29, 0
    %p223 = por %p221, %p222
    %p224 = scmp.ne.s32.totalorder %s212, %s213
    %p225 = scmp.eq.s32.totalorder %s30, 1
    %p226 = por %p224, %p225
    %p228 = scmp.ne.s32.totalorder %s213, %s227
    %p229 = scmp.eq.s32.totalorder %s30, 0
    %p230 = por %p228, %p229
    %s232 = sadd.s32 %s231, 1
    %p235 = scmp.eq.s32.totalorder %s24, 1
    %p236 = scmp.ne.s32.totalorder %s231, %s233
    %p237 = scmp.eq.s32.totalorder %s24, 0
    %p238 = por %p236, %p237
    %p239 = scmp.ne.s32.totalorder %s231, %s233
    %p240 = scmp.eq.s32.totalorder %s29, 1
    %p241 = por %p239, %p240
    %p242 = scmp.ne.s32.totalorder %s233, %s234
    %p243 = scmp.eq.s32.totalorder %s29, 0
    %p244 = por %p242, %p243
    %p245 = scmp.ne.s32.totalorder %s233, %s234
    %p246 = scmp.eq.s32.totalorder %s30, 1
    %p247 = por %p245, %p246
    %p249 = scmp.ne.s32.totalorder %s234, %s248
    %p250 = scmp.eq.s32.totalorder %s30, 0
    %p251 = por %p249, %p250
    %s253 = sadd.s32 %s252, 1
    %p256 = scmp.eq.s32.totalorder %s24, 1
    %p257 = scmp.ne.s32.totalorder %s252, %s254
    %p258 = scmp.eq.s32.totalorder %s24, 0
    %p259 = por %p257, %p258
    %p260 = scmp.ne.s32.totalorder %s252, %s254
    %p261 = scmp.eq.s32.totalorder %s29, 1
    %p262 = por %p260, %p261
    %p263 = scmp.ne.s32.totalorder %s254, %s255
    %p264 = scmp.eq.s32.totalorder %s29, 0
    %p265 = por %p263, %p264
    %p266 = scmp.ne.s32.totalorder %s254, %s255
    %p267 = scmp.eq.s32.totalorder %s30, 1
    %p268 = por %p266, %p267
    %p270 = scmp.ne.s32.totalorder %s255, %s269
    %p271 = scmp.eq.s32.totalorder %s30, 0
    %p272 = por %p270, %p271
    %s274 = sadd.s32 %s273, 1
    %p277 = scmp.eq.s32.totalorder %s24, 1
    %p278 = scmp.ne.s32.totalorder %s273, %s275
    %p279 = scmp.eq.s32.totalorder %s24, 0
    %p280 = por %p278, %p279
    %p281 = scmp.ne.s32.totalorder %s273, %s275
    %p282 = scmp.eq.s32.totalorder %s29, 1
    %p283 = por %p281, %p282
    %p284 = scmp.ne.s32.totalorder %s275, %s276
    %p285 = scmp.eq.s32.totalorder %s29, 0
    %p286 = por %p284, %p285
    %p287 = scmp.ne.s32.totalorder %s275, %s276
    %p288 = scmp.eq.s32.totalorder %s30, 1
    %p289 = por %p287, %p288
    %p291 = scmp.ne.s32.totalorder %s276, %s290
    %p292 = scmp.eq.s32.totalorder %s30, 0
    %p293 = por %p291, %p292
    %s295 = sadd.s32 %s294, 1
    %p298 = scmp.eq.s32.totalorder %s24, 1
    %p299 = scmp.ne.s32.totalorder %s294, %s296
    %p300 = scmp.eq.s32.totalorder %s24, 0
    %p301 = por %p299, %p300
    %p302 = scmp.ne.s32.totalorder %s294, %s296
    %p303 = scmp.eq.s32.totalorder %s29, 1
    %p304 = por %p302, %p303
    %p305 = scmp.ne.s32.totalorder %s296, %s297
    %p306 = scmp.eq.s32.totalorder %s29, 0
    %p307 = por %p305, %p306
    %p308 = scmp.ne.s32.totalorder %s296, %s297
    %p309 = scmp.eq.s32.totalorder %s30, 1
    %p310 = por %p308, %p309
    %p312 = scmp.ne.s32.totalorder %s297, %s311
    %p313 = scmp.eq.s32.totalorder %s30, 0
    %p314 = por %p312, %p313
    %s316 = sadd.s32 %s315, 1
    %p319 = scmp.eq.s32.totalorder %s24, 1
    %p320 = scmp.ne.s32.totalorder %s315, %s317
    %p321 = scmp.eq.s32.totalorder %s24, 0
    %p322 = por %p320, %p321
    %p323 = scmp.ne.s32.totalorder %s315, %s317
    %p324 = scmp.eq.s32.totalorder %s29, 1
    %p325 = por %p323, %p324
    %p326 = scmp.ne.s32.totalorder %s317, %s318
    %p327 = scmp.eq.s32.totalorder %s29, 0
    %p328 = por %p326, %p327
    %p329 = scmp.ne.s32.totalorder %s317, %s318
    %p330 = scmp.eq.s32.totalorder %s30, 1
    %p331 = por %p329, %p330
    %p333 = scmp.ne.s32.totalorder %s318, %s332
    %p334 = scmp.eq.s32.totalorder %s30, 0
    %p335 = por %p333, %p334
    %s337 = sadd.s32 %s336, 1
    %p340 = scmp.eq.s32.totalorder %s24, 1
    %p341 = scmp.ne.s32.totalorder %s336, %s338
    %p342 = scmp.eq.s32.totalorder %s24, 0
    %p343 = por %p341, %p342
    %p344 = scmp.ne.s32.totalorder %s336, %s338
    %p345 = scmp.eq.s32.totalorder %s29, 1
    %p346 = por %p344, %p345
    %p347 = scmp.ne.s32.totalorder %s338, %s339
    %p348 = scmp.eq.s32.totalorder %s29, 0
    %p349 = por %p347, %p348
    %p350 = scmp.ne.s32.totalorder %s338, %s339
    %p351 = scmp.eq.s32.totalorder %s30, 1
    %p352 = por %p350, %p351
    %p354 = scmp.ne.s32.totalorder %s339, %s353
    %p355 = scmp.eq.s32.totalorder %s30, 0
    %p356 = por %p354, %p355
    %s358 = sadd.s32 %s357, 1
    %p361 = scmp.eq.s32.totalorder %s24, 1
    %p362 = scmp.ne.s32.totalorder %s357, %s359
    %p363 = scmp.eq.s32.totalorder %s24, 0
    %p364 = por %p362, %p363
    %p365 = scmp.ne.s32.totalorder %s357, %s359
    %p366 = scmp.eq.s32.totalorder %s29, 1
    %p367 = por %p365, %p366
    %p368 = scmp.ne.s32.totalorder %s359, %s360
    %p369 = scmp.eq.s32.totalorder %s29, 0
    %p370 = por %p368, %p369
    %p371 = scmp.ne.s32.totalorder %s359, %s360
    %p372 = scmp.eq.s32.totalorder %s30, 1
    %p373 = por %p371, %p372
    %p375 = scmp.ne.s32.totalorder %s360, %s374
    %p376 = scmp.eq.s32.totalorder %s30, 0
    %p377 = por %p375, %p376
    %s378 = ssub.s32 %s24, %s31
    %p379 = scmp.eq.s32.totalorder %s378, 0
    %s381 = sadd.s32 %s380, 1
    %s382 = scalar_select %p379, %s380, %s381
    %p385 = pneg %p379
    %p386 = scmp.eq.s32.totalorder %s24, 1
    %p387 = por %p385, %p386
    %p388 = scmp.ne.s32.totalorder %s380, %s383
    %p389 = scmp.eq.s32.totalorder %s24, 0
    %p390 = por %p388, %p389
    %p391 = scmp.ne.s32.totalorder %s380, %s383
    %p392 = scmp.eq.s32.totalorder %s29, 1
    %p393 = por %p391, %p392
    %p394 = scmp.ne.s32.totalorder %s383, %s384
    %p395 = scmp.eq.s32.totalorder %s29, 0
    %p396 = por %p394, %p395
    %p397 = scmp.ne.s32.totalorder %s383, %s384
    %p398 = scmp.eq.s32.totalorder %s30, 1
    %p399 = por %p397, %p398
    %p401 = scmp.ne.s32.totalorder %s384, %s400
    %p402 = scmp.eq.s32.totalorder %s30, 0
    %p403 = por %p401, %p402
    %p404 = scmp.le.s32.totalorder 1, %s24
    %p405 = scmp.lt.s32.totalorder %s24, 3
    %p406 = pnand %p404, %p405
    %p407 = pneg %p406
    // Predicated region
    $region9: #{up_att_forward.1} parent=5 // pred_check
      _
    $region10: #{up_att_forward.1} parent=5 // pred_check_branch
      %409 = sbr.rel (%p406) target = $region12
    $region11: #{up_att_forward.1} parent=5 // pred_region
      %s410 = ssub.s32 %s24, 1
      // Predicated region
      $region13: #{up_att_forward.1} parent=11 // pred_check
        %p411 = pneg %p97
      $region14: #{up_att_forward.1} parent=11 // pred_check_branch
        %413 = sbr.rel (%p411) target = $region16
      $region15: #{up_att_forward.1} parent=11 // pred_region
        _
      $region16: #{up_att_forward.1} parent=11 // pred_fallthru
        _
      // Predicated region
      $region17: #{up_att_forward.1} parent=11 // pred_check
        %p414 = pneg %p118
      $region18: #{up_att_forward.1} parent=11 // pred_check_branch
        %416 = sbr.rel (%p414) target = $region20
      $region19: #{up_att_forward.1} parent=11 // pred_region
        _
      $region20: #{up_att_forward.1} parent=11 // pred_fallthru
        _
      // Predicated region
      $region21: #{up_att_forward.1} parent=11 // pred_check
        %p417 = pneg %p139
      $region22: #{up_att_forward.1} parent=11 // pred_check_branch
        %419 = sbr.rel (%p417) target = $region24
      $region23: #{up_att_forward.1} parent=11 // pred_region
        _
      $region24: #{up_att_forward.1} parent=11 // pred_fallthru
        _
      // Predicated region
      $region25: #{up_att_forward.1} parent=11 // pred_check
        %p420 = pneg %p160
      $region26: #{up_att_forward.1} parent=11 // pred_check_branch
        %422 = sbr.rel (%p420) target = $region28
      $region27: #{up_att_forward.1} parent=11 // pred_region
        _
      $region28: #{up_att_forward.1} parent=11 // pred_fallthru
        _
      // Predicated region
      $region29: #{up_att_forward.1} parent=11 // pred_check
        %p423 = pneg %p181
      $region30: #{up_att_forward.1} parent=11 // pred_check_branch
        %425 = sbr.rel (%p423) target = $region32
      $region31: #{up_att_forward.1} parent=11 // pred_region
        _
      $region32: #{up_att_forward.1} parent=11 // pred_fallthru
        _
      // Predicated region
      $region33: #{up_att_forward.1} parent=11 // pred_check
        %p426 = pneg %p202
      $region34: #{up_att_forward.1} parent=11 // pred_check_branch
        %428 = sbr.rel (%p426) target = $region36
      $region35: #{up_att_forward.1} parent=11 // pred_region
        _
      $region36: #{up_att_forward.1} parent=11 // pred_fallthru
        _
      // Predicated region
      $region37: #{up_att_forward.1} parent=11 // pred_check
        %p429 = pneg %p223
      $region38: #{up_att_forward.1} parent=11 // pred_check_branch
        %431 = sbr.rel (%p429) target = $region40
      $region39: #{up_att_forward.1} parent=11 // pred_region
        _
      $region40: #{up_att_forward.1} parent=11 // pred_fallthru
        _
      // Predicated region
      $region41: #{up_att_forward.1} parent=11 // pred_check
        %p432 = pneg %p244
      $region42: #{up_att_forward.1} parent=11 // pred_check_branch
        %434 = sbr.rel (%p432) target = $region44
      $region43: #{up_att_forward.1} parent=11 // pred_region
        _
      $region44: #{up_att_forward.1} parent=11 // pred_fallthru
        _
      // Predicated region
      $region45: #{up_att_forward.1} parent=11 // pred_check
        %p435 = pneg %p265
      $region46: #{up_att_forward.1} parent=11 // pred_check_branch
        %437 = sbr.rel (%p435) target = $region48
      $region47: #{up_att_forward.1} parent=11 // pred_region
        _
      $region48: #{up_att_forward.1} parent=11 // pred_fallthru
        _
      // Predicated region
      $region49: #{up_att_forward.1} parent=11 // pred_check
        %p438 = pneg %p286
      $region50: #{up_att_forward.1} parent=11 // pred_check_branch
        %440 = sbr.rel (%p438) target = $region52
      $region51: #{up_att_forward.1} parent=11 // pred_region
        _
      $region52: #{up_att_forward.1} parent=11 // pred_fallthru
        _
      // Predicated region
      $region53: #{up_att_forward.1} parent=11 // pred_check
        %p441 = pneg %p307
      $region54: #{up_att_forward.1} parent=11 // pred_check_branch
        %443 = sbr.rel (%p441) target = $region56
      $region55: #{up_att_forward.1} parent=11 // pred_region
        _
      $region56: #{up_att_forward.1} parent=11 // pred_fallthru
        _
      // Predicated region
      $region57: #{up_att_forward.1} parent=11 // pred_check
        %p444 = pneg %p328
      $region58: #{up_att_forward.1} parent=11 // pred_check_branch
        %446 = sbr.rel (%p444) target = $region60
      $region59: #{up_att_forward.1} parent=11 // pred_region
        _
      $region60: #{up_att_forward.1} parent=11 // pred_fallthru
        _
      // Predicated region
      $region61: #{up_att_forward.1} parent=11 // pred_check
        %p447 = pneg %p349
      $region62: #{up_att_forward.1} parent=11 // pred_check_branch
        %449 = sbr.rel (%p447) target = $region64
      $region63: #{up_att_forward.1} parent=11 // pred_region
        _
      $region64: #{up_att_forward.1} parent=11 // pred_fallthru
        _
      // Predicated region
      $region65: #{up_att_forward.1} parent=11 // pred_check
        %p450 = pneg %p370
      $region66: #{up_att_forward.1} parent=11 // pred_check_branch
        %452 = sbr.rel (%p450) target = $region68
      $region67: #{up_att_forward.1} parent=11 // pred_region
        _
      $region68: #{up_att_forward.1} parent=11 // pred_fallthru
        _
    $region12: #{up_att_forward.1} parent=5 // pred_fallthru
      _
    %p453 = scmp.lt.s32.totalorder %s24, 2
    // Predicated region
    $region69: #{up_att_forward.1} parent=5 // pred_check
      %p454 = pneg %p453
    $region70: #{up_att_forward.1} parent=5 // pred_check_branch
      %456 = sbr.rel (%p454) target = $region72
    $region71: #{up_att_forward.1} parent=5 // pred_region
      // Predicated region
      $region73: #{up_att_forward.1} parent=71 // pred_check
        %p457 = pneg %p44
      $region74: #{up_att_forward.1} parent=71 // pred_check_branch
        %459 = sbr.rel (%p457) target = $region76
      $region75: #{up_att_forward.1} parent=71 // pred_region
        %p460 = scmp.lt.s32.totalorder %s24, 1
        %s461 = scalar_select %p460, %s24, 1
        %s462 = smul.addr %s461, 2
        %s463 = smul.addr %s462, 8
        %s464 = scalar_lea.vmem %s0, %s463
      $region76: #{up_att_forward.1} parent=71 // pred_fallthru
        _
      // Predicated region
      $region77: #{up_att_forward.1} parent=71 // pred_check
        %p465 = pneg %p70
      $region78: #{up_att_forward.1} parent=71 // pred_check_branch
        %467 = sbr.rel (%p465) target = $region80
      $region79: #{up_att_forward.1} parent=71 // pred_region
        %p468 = scmp.lt.s32.totalorder %s24, 1
        %s469 = scalar_select %p468, %s24, 1
        %s470 = smul.addr %s469, 2
        %s471 = smul.addr %s470, 8
        %s472 = scalar_lea.vmem %s1, %s471
      $region80: #{up_att_forward.1} parent=71 // pred_fallthru
        _
    $region72: #{up_att_forward.1} parent=5 // pred_fallthru
      _
    %p473 = scmp.le.s32.totalorder 1, %s24
    %p474 = scmp.lt.s32.totalorder %s24, 3
    %p475 = pnand %p473, %p474
    %p476 = pneg %p475
    // Predicated region
    $region81: #{up_att_forward.1} parent=5 // pred_check
      _
    $region82: #{up_att_forward.1} parent=5 // pred_check_branch
      %478 = sbr.rel (%p475) target = $region84
    $region83: #{up_att_forward.1} parent=5 // pred_region
      %s479 = ssub.s32 %s24, 1
      %p480 = scmp.lt.s32.totalorder %s29, 1
      %s481 = scalar_select %p480, %s29, 1
      %s482 = smul.addr %s481, 2
      %s483 = smul.addr %s482, 8
      %s484 = scalar_lea.vmem %s0, %s483
      %p485 = pneg %p50
      %p486 = pneg %p47
      %p487 = scmp.lt.s32.totalorder %s29, 1
      %s488 = scalar_select %p487, %s29, 1
      %s489 = smul.addr %s488, 2
      %s490 = smul.addr %s489, 8
      %s491 = scalar_lea.vmem %s1, %s490
      %p492 = pneg %p76
      %p493 = pneg %p73
      %p494 = pneg %p97
      %p495 = pneg %p94
      %p496 = pneg %p118
      %p497 = pneg %p115
      %p498 = pneg %p139
      %p499 = pneg %p136
      %p500 = pneg %p160
      %p501 = pneg %p157
      %p502 = pneg %p181
      %p503 = pneg %p178
      %p504 = pneg %p202
      %p505 = pneg %p199
      %p506 = pneg %p223
      %p507 = pneg %p220
      %p508 = pneg %p244
      %p509 = pneg %p241
      %p510 = pneg %p265
      %p511 = pneg %p262
      %p512 = pneg %p286
      %p513 = pneg %p283
      %p514 = pneg %p307
      %p515 = pneg %p304
      %p516 = pneg %p328
      %p517 = pneg %p325
      %p518 = pneg %p349
      %p519 = pneg %p346
      %p520 = pneg %p370
      %p521 = pneg %p367
      %p522 = pneg %p396
      %p523 = pneg %p393
      %p524 = scmp.lt.s32.totalorder %s29, 1
      %s525 = scalar_select %p524, %s29, 1
      %s526 = smul.addr %s525, 2
      %s527 = smul.addr %s526, 8
      %s528 = scalar_lea.vmem %s16, %s527
      %p529 = scmp.lt.s32.totalorder %s29, 1
      %s530 = scalar_select %p529, %s29, 1
      %s531 = smul.addr %s530, 2
      %s532 = smul.addr %s531, 8
      %s533 = scalar_lea.vmem %s0, %s532
      %p534 = scmp.lt.s32.totalorder %s29, 1
      %s535 = scalar_select %p534, %s29, 1
      %s536 = smul.addr %s535, 2
      %s537 = smul.addr %s536, 8
      %s538 = scalar_lea.vmem %s1, %s537
      %p539 = scmp.lt.s32.totalorder %s29, 1
      %s540 = scalar_select %p539, %s29, 1
      %s541 = smul.addr %s540, 2
      %s542 = smul.addr %s541, 8
      %s543 = scalar_lea.vmem %s16, %s542
      %v545 = vld [vmem:[%s533] sm:$0xff]
      %v546 = vld [vmem:[%s533 + $0x8] sm:$0xff]
      %v547 = vpack.c.bf16 %v546, %v545
      %v548 = vld [vmem:[%s538] sm:$0xff]
      %v549 = vld [vmem:[%s538 + $0x8] sm:$0xff]
      %v550 = vld [vmem:[%s3] sm:$0xff]
      %v551 = vld [vmem:[%s3 + $0x8] sm:$0xff]
      %v552 = vld [vmem:[%s3 + $0x10] sm:$0x1]
      %v553 = vld [vmem:[%s3 + $0x18] sm:$0x1]
      %v554 = vld [vmem:[%s4] sm:$0xf]
      %v555 = vld [vmem:[%s4 + $0x4] sm:$0x3]
      %v558 = vunpack.c.l.b16 %v554
      %v559 = vunpack.c.l.b16 %v555
      %v560 = vpack.c.b16 %v559, %v558
      %vm561 = vcmask 130048
      %v563 = vsel %vm561, %v560, 0
      %565 = vmatprep.subr.bf16.mxu0 0
      %566 = vmatpush1.bf16.msra.mxu0 0
      %567 = vmatprep.subr.bf16.mxu0 0
      %568 = vmatpush1.bf16.msra.mxu0 0
      %569 = vmatprep.subr.bf16.mxu0 0
      %570 = vmatpush1.bf16.msra.mxu0 0
      %571 = vmatprep.subr.bf16.mxu0 0
      %572 = vmatpush1.bf16.msra.mxu0 0
      %573 = vmatprep.subr.bf16.mxu0 0
      %574 = vmatpush1.bf16.msra.mxu0 0
      %575 = vmatprep.subr.bf16.mxu0 0
      %576 = vmatpush1.bf16.msra.mxu0 0
      %577 = vmatprep.subr.bf16.mxu0 0
      %578 = vmatpush1.bf16.msra.mxu0 0
      %579 = vmatprep.subr.bf16.mxu0 0
      %580 = vmatpush1.bf16.msra.mxu0 %v547
      %581 = vmatprep.subr.bf16.mxu0 0
      %582 = vmatpush2.bf16.msra.mxu0 0
      %583 = vmatprep.subr.bf16.mxu0 0
      %584 = vmatpush2.bf16.msra.mxu0 0
      %585 = vmatprep.subr.bf16.mxu0 0
      %586 = vmatpush2.bf16.msra.mxu0 0
      %587 = vmatprep.subr.bf16.mxu0 0
      %588 = vmatpush2.bf16.msra.mxu0 0
      %589 = vmatprep.subr.bf16.mxu0 0
      %590 = vmatpush2.bf16.msra.mxu0 0
      %591 = vmatprep.subr.bf16.mxu0 0
      %592 = vmatpush2.bf16.msra.mxu0 0
      %593 = vmatprep.subr.bf16.mxu0 0
      %594 = vmatpush2.bf16.msra.mxu0 0
      %595 = vmatprep.subr.bf16.mxu0 0
      %596 = vmatpush2.bf16.msra.mxu0 0
      %597 = vmatprep.mubr.bf16.mxu0 0
      %598 = vmatmul.mubr.bf16.gmra.mxu0 %v563
      %v599 = vpop.f32.mrf.mxu0
      %v600 = vadd.f32 0.0, %v599
      %v601 = vpop.f32.mrf.mxu0
      %v602 = vpop.f32.mrf.mxu0
      %v603 = vadd.f32 0.0, %v602
      %v604 = vpop.f32.mrf.mxu0
      %605 = vdwg.mxu0
      %v606 = vpack.c.bf16 %v603, %v600
      %v607 = vld [vmem:[%s2] sm:$0xff]
      %v608 = vld [vmem:[%s2 + $0x8] sm:$0xff]
      %v609 = vld [vmem:[%s2 + $0x10] sm:$0xff]
      %v610 = vld [vmem:[%s2 + $0x18] sm:$0xff]
      %v611 = vld [vmem:[%s2 + $0x20] sm:$0xff]
      %v612 = vld [vmem:[%s2 + $0x28] sm:$0xff]
      %v613 = vld [vmem:[%s2 + $0x30] sm:$0xff]
      %v614 = vld [vmem:[%s2 + $0x38] sm:$0xff]
      %v615 = vld [vmem:[%s5] sm:$0xff]
      %v616 = vld [vmem:[%s5 + $0x8] sm:$0xf]
      %618 = vset.pattern.permute.xlu0 0
      %619 = vperm.xlu0 %618, %v615
      %v620 = vpop.permute.xlu0 %619
      %623 = vset.pattern.permute.xlu0 0
      %624 = vperm.xlu0 %623, %v616
      %v625 = vpop.permute.xlu0 %624
      %v635 = vunpack.c.l.b16 %v607
      %v636 = vunpack.c.h.b16 %v607
      %v637 = vunpack.c.l.b16 %v608
      %v638 = vunpack.c.h.b16 %v608
      %v639 = vunpack.c.l.b16 %v609
      %v640 = vunpack.c.h.b16 %v609
      %v641 = vunpack.c.l.b16 %v610
      %v642 = vunpack.c.h.b16 %v610
      %v643 = vunpack.c.l.b16 %v611
      %v644 = vunpack.c.h.b16 %v611
      %v645 = vunpack.c.l.b16 %v612
      %v646 = vunpack.c.h.b16 %v612
      %v647 = vunpack.c.l.b16 %v613
      %v648 = vunpack.c.h.b16 %v613
      %v649 = vunpack.c.l.b16 %v614
      %v650 = vunpack.c.h.b16 %v614
      %v651 = vpack.c.b16 %v637, %v635
      %v652 = vpack.c.b16 %v638, %v636
      %v653 = vpack.c.b16 %v641, %v639
      %v654 = vpack.c.b16 %v642, %v640
      %v655 = vpack.c.b16 %v645, %v643
      %v656 = vpack.c.b16 %v646, %v644
      %v657 = vpack.c.b16 %v649, %v647
      %v658 = vpack.c.b16 %v650, %v648
      %vm667 = vcmask 523264
      %v669 = vsel %vm667, %v606, 0
      %671 = vmatprep.subr.bf16.mxu0 0
      %672 = vmatpush1.bf16.msra.mxu0 0
      %673 = vmatprep.subr.bf16.mxu0 0
      %674 = vmatpush1.bf16.msra.mxu0 0
      %675 = vmatprep.subr.bf16.mxu0 0
      %676 = vmatpush1.bf16.msra.mxu0 0
      %677 = vmatprep.subr.bf16.mxu0 0
      %678 = vmatpush1.bf16.msra.mxu0 0
      %679 = vmatprep.subr.bf16.mxu0 %v658
      %680 = vmatpush1.bf16.msra.mxu0 %v657
      %681 = vmatprep.subr.bf16.mxu0 %v656
      %682 = vmatpush1.bf16.msra.mxu0 %v655
      %683 = vmatprep.subr.bf16.mxu0 %v654
      %684 = vmatpush1.bf16.msra.mxu0 %v653
      %685 = vmatprep.subr.bf16.mxu0 %v652
      %686 = vmatpush1.bf16.msra.mxu0 %v651
      %687 = vmatprep.subr.bf16.mxu0 0
      %688 = vmatpush2.bf16.msra.mxu0 0
      %689 = vmatprep.subr.bf16.mxu0 0
      %690 = vmatpush2.bf16.msra.mxu0 0
      %691 = vmatprep.subr.bf16.mxu0 0
      %692 = vmatpush2.bf16.msra.mxu0 0
      %693 = vmatprep.subr.bf16.mxu0 0
      %694 = vmatpush2.bf16.msra.mxu0 0
      %695 = vmatprep.subr.bf16.mxu0 0
      %696 = vmatpush2.bf16.msra.mxu0 0
      %697 = vmatprep.subr.bf16.mxu0 0
      %698 = vmatpush2.bf16.msra.mxu0 0
      %699 = vmatprep.subr.bf16.mxu0 0
      %700 = vmatpush2.bf16.msra.mxu0 0
      %701 = vmatprep.subr.bf16.mxu0 0
      %702 = vmatpush2.bf16.msra.mxu0 0
      %703 = vmatprep.mubr.bf16.mxu0 0
      %704 = vmatmul.mubr.bf16.gmra.mxu0 %v669
      %v705 = vpop.f32.mrf.mxu0
      %v706 = vadd.f32 %v620, %v705
      %v707 = vpop.f32.mrf.mxu0
      %v708 = vadd.f32 %v620, %v707
      %v709 = vpop.f32.mrf.mxu0
      %v710 = vadd.f32 %v625, %v709
      %v711 = vpop.f32.mrf.mxu0
      %v712 = vadd.f32 %v625, %v711
      %713 = vdwg.mxu0
      %v714 = vld [vmem:[%s6] sm:$0x3]
      %v715 = vpack.c.bf16 %v548, %v548
      %v716 = vpack.c.bf16 %v549, %v549
      %v717 = vld [vmem:[%s7] sm:$0xf]
      %719 = vset.pattern.permute.xlu0 0
      %720 = vperm.xlu0 %719, %v717
      %v721 = vpop.permute.xlu0 %720
      %vm723 = vcmask 64512
      %v725 = vsel %vm723, %v714, 0
      %vm727 = vcmask 1043456
      %v729 = vsel %vm727, %v715, 0
      %v732 = vsel %vm727, %v716, 0
      %734 = vmatprep.subr.bf16.mxu0 0
      %735 = vmatpush1.bf16.msra.mxu0 0
      %736 = vmatprep.subr.bf16.mxu0 0
      %737 = vmatpush1.bf16.msra.mxu0 0
      %738 = vmatprep.subr.bf16.mxu0 0
      %739 = vmatpush1.bf16.msra.mxu0 0
      %740 = vmatprep.subr.bf16.mxu0 0
      %741 = vmatpush1.bf16.msra.mxu0 0
      %742 = vmatprep.subr.bf16.mxu0 0
      %743 = vmatpush1.bf16.msra.mxu0 0
      %744 = vmatprep.subr.bf16.mxu0 0
      %745 = vmatpush1.bf16.msra.mxu0 0
      %746 = vmatprep.subr.bf16.mxu0 0
      %747 = vmatpush1.bf16.msra.mxu0 0
      %748 = vmatprep.subr.bf16.mxu0 %v732
      %749 = vmatpush1.bf16.msra.mxu0 %v729
      %750 = vmatprep.subr.bf16.mxu0 0
      %751 = vmatpush2.bf16.msra.mxu0 0
      %752 = vmatprep.subr.bf16.mxu0 0
      %753 = vmatpush2.bf16.msra.mxu0 0
      %754 = vmatprep.subr.bf16.mxu0 0
      %755 = vmatpush2.bf16.msra.mxu0 0
      %756 = vmatprep.subr.bf16.mxu0 0
      %757 = vmatpush2.bf16.msra.mxu0 0
      %758 = vmatprep.subr.bf16.mxu0 0
      %759 = vmatpush2.bf16.msra.mxu0 0
      %760 = vmatprep.subr.bf16.mxu0 0
      %761 = vmatpush2.bf16.msra.mxu0 0
      %762 = vmatprep.subr.bf16.mxu0 0
      %763 = vmatpush2.bf16.msra.mxu0 0
      %764 = vmatprep.subr.bf16.mxu0 0
      %765 = vmatpush2.bf16.msra.mxu0 0
      %766 = vmatprep.mubr.bf16.mxu0 0
      %767 = vmatmul.mubr.bf16.gmra.mxu0 %v725
      %v768 = vpop.f32.mrf.mxu0
      %v769 = vadd.f32 %v721, %v768
      %v770 = vpop.f32.mrf.mxu0
      %v771 = vadd.f32 %v721, %v770
      %v772 = vpop.f32.mrf.mxu0
      %v773 = vpop.f32.mrf.mxu0
      %774 = vdwg.mxu0
      %v775 = vadd.f32 %v710, %v769
      %v776 = vadd.f32 %v712, %v771
      %v777 = vmax.f32 %v775, 0.0
      %v778 = vmax.f32 %v776, 0.0
      %v779 = vld [vmem:[%s8] sm:$0xf]
      %781 = vset.pattern.permute.xlu0 0
      %782 = vperm.xlu0 %781, %v779
      %v783 = vpop.permute.xlu0 %782
      %v785 = vmul.f32 %v777, %v783
      %v786 = vmul.f32 %v778, %v783
      %v787 = vsel %vm727, %v785, 0.0
      %v788 = vrot.slane %v787, 4
      %v789 = vadd.f32 %v787, %v788
      %v790 = vrot.slane %v789, 2
      %v791 = vadd.f32 %v789, %v790
      %v792 = vrot.slane %v791, 1
      %v793 = vadd.f32 %v791, %v792
      %v794 = vsel %vm727, %v786, 0.0
      %v795 = vrot.slane %v794, 4
      %v796 = vadd.f32 %v794, %v795
      %v797 = vrot.slane %v796, 2
      %v798 = vadd.f32 %v796, %v797
      %v799 = vrot.slane %v798, 1
      %v800 = vadd.f32 %v798, %v799
      %v801 = vld [vmem:[#allocation2] sm:$0x1]
      %803 = vset.pattern.permute.xlu0 0
      %804 = vperm.xlu0 %803, %v801
      %v805 = vpop.permute.xlu0 %804
      %v807 = vlaneseq
      %v808 = vshrl.u32 %v807, 7
      %v809 = vsub.s32 0, %v808
      %v810 = vrot.slane %v805, %v809
      %v811 = vadd.f32 %v793, %v810
      %v812 = vadd.f32 %v800, %v810
      %v813 = vxor.u32 %v811, 2147483648
      %v814 = vxor.u32 %v812, 2147483648
      %v815 = vmul.f32 %v813, 1.442695
      %v816 = vpow.pop %v815
      %v817 = vmul.f32 %v814, 1.442695
      %v818 = vpow.pop %v817
      %v819 = vadd.f32 %v816, 1.0
      %v820 = vadd.f32 %v818, 1.0
      %v821 = vrcp.pop %v819
      %v822 = vmul.f32 1.0, %v821
      %v823 = vrcp.pop %v820
      %v824 = vmul.f32 1.0, %v823
      %v825 = vmul.f32 %v548, %v822
      %v826 = vmul.f32 %v549, %v824
      %v827 = vld [vmem:[%s10] sm:$0xff]
      %v828 = vld [vmem:[%s11] sm:$0xff]
      %v829 = vld [vmem:[%s12] sm:$0xff]
      %830 = vrot.lane.b32.xlu0 %v825, 17
      %v831 = vpop.permute.xlu0 %830
      %832 = vrot.lane.b32.xlu0 %v706, 17
      %v833 = vpop.permute.xlu0 %832
      %834 = vrot.lane.b32.xlu0 %v826, 17
      %v835 = vpop.permute.xlu0 %834
      %836 = vrot.lane.b32.xlu0 %v708, 17
      %v837 = vpop.permute.xlu0 %836
      %v838 = vlaneseq
      %v839 = vand.u32 %v838, 127
      %vm840 = vcmp.lt.s32.totalorder %v839, 17
      %v841 = vsel %vm840, %v831, %v835
      %v842 = vsel %vm840, %v833, %v837
      %v843 = vsel %vm840, %v835, %v831
      %v844 = vsel %vm840, %v837, %v833
      %v845 = vlaneseq
      %v846 = vshrl.u32 %v845, 7
      %v847 = vsub.s32 0, %v846
      %v848 = vrot.slane %v550, %v847
      %v849 = vlaneseq
      %v850 = vshrl.u32 %v849, 7
      %v851 = vsub.s32 0, %v850
      %v852 = vrot.slane %v551, %v851
      %v853 = vmul.f32 %v843, %v848
      %v854 = vmul.f32 %v841, %v852
      %v855 = vmul.f32 %v844, %v848
      %v856 = vmul.f32 %v842, %v852
      %857 = vrot.lane.b32.xlu0 %v825, 16
      %v858 = vpop.permute.xlu0 %857
      %859 = vrot.lane.b32.xlu0 %v706, 16
      %v860 = vpop.permute.xlu0 %859
      %861 = vrot.lane.b32.xlu0 %v826, 16
      %v862 = vpop.permute.xlu0 %861
      %863 = vrot.lane.b32.xlu0 %v708, 16
      %v864 = vpop.permute.xlu0 %863
      %vm865 = vcmp.lt.s32.totalorder %v839, 16
      %v866 = vsel %vm865, %v858, %v862
      %v867 = vsel %vm865, %v860, %v864
      %v868 = vsel %vm865, %v862, %v858
      %v869 = vsel %vm865, %v864, %v860
      %v870 = vlaneseq
      %v871 = vshrl.u32 %v870, 7
      %v872 = vsub.s32 1, %v871
      %v873 = vrot.slane %v550, %v872
      %v874 = vlaneseq
      %v875 = vshrl.u32 %v874, 7
      %v876 = vsub.s32 1, %v875
      %v877 = vrot.slane %v551, %v876
      %v878 = vmul.f32 %v868, %v873
      %v879 = vmul.f32 %v866, %v877
      %v880 = vmul.f32 %v869, %v873
      %v881 = vmul.f32 %v867, %v877
      %882 = vrot.lane.b32.xlu0 %v825, 15
      %v883 = vpop.permute.xlu0 %882
      %884 = vrot.lane.b32.xlu0 %v706, 15
      %v885 = vpop.permute.xlu0 %884
      %886 = vrot.lane.b32.xlu0 %v826, 15
      %v887 = vpop.permute.xlu0 %886
      %888 = vrot.lane.b32.xlu0 %v708, 15
      %v889 = vpop.permute.xlu0 %888
      %vm890 = vcmp.lt.s32.totalorder %v839, 15
      %v891 = vsel %vm890, %v883, %v887
      %v892 = vsel %vm890, %v885, %v889
      %v893 = vsel %vm890, %v887, %v883
      %v894 = vsel %vm890, %v889, %v885
      %v895 = vlaneseq
      %v896 = vshrl.u32 %v895, 7
      %v897 = vsub.s32 2, %v896
      %v898 = vrot.slane %v550, %v897
      %v899 = vlaneseq
      %v900 = vshrl.u32 %v899, 7
      %v901 = vsub.s32 2, %v900
      %v902 = vrot.slane %v551, %v901
      %v903 = vmul.f32 %v893, %v898
      %v904 = vmul.f32 %v891, %v902
      %v905 = vmul.f32 %v894, %v898
      %v906 = vmul.f32 %v892, %v902
      %907 = vrot.lane.b32.xlu0 %v825, 1
      %v908 = vpop.permute.xlu0 %907
      %909 = vrot.lane.b32.xlu0 %v706, 1
      %v910 = vpop.permute.xlu0 %909
      %911 = vrot.lane.b32.xlu0 %v826, 1
      %v912 = vpop.permute.xlu0 %911
      %913 = vrot.lane.b32.xlu0 %v708, 1
      %v914 = vpop.permute.xlu0 %913
      %vm915 = vcmp.lt.s32.totalorder %v839, 1
      %v916 = vsel %vm915, %v908, %v912
      %v917 = vsel %vm915, %v910, %v914
      %v918 = vsel %vm915, %v912, %v908
      %v919 = vsel %vm915, %v914, %v910
      %v920 = vlaneseq
      %v921 = vshrl.u32 %v920, 7
      %v922 = vsub.s32 3, %v921
      %v923 = vrot.slane %v550, %v922
      %v924 = vlaneseq
      %v925 = vshrl.u32 %v924, 7
      %v926 = vsub.s32 3, %v925
      %v927 = vrot.slane %v551, %v926
      %v928 = vmul.f32 %v918, %v923
      %v929 = vmul.f32 %v916, %v927
      %v930 = vmul.f32 %v919, %v923
      %v931 = vmul.f32 %v917, %v927
      %932 = vrot.lane.b32.xlu0 %v825, 127
      %v933 = vpop.permute.xlu0 %932
      %934 = vrot.lane.b32.xlu0 %v706, 127
      %v935 = vpop.permute.xlu0 %934
      %936 = vrot.lane.b32.xlu0 %v826, 127
      %v937 = vpop.permute.xlu0 %936
      %938 = vrot.lane.b32.xlu0 %v708, 127
      %v939 = vpop.permute.xlu0 %938
      %vm940 = vcmp.lt.s32.totalorder %v839, 127
      %v941 = vsel %vm940, %v933, %v937
      %v942 = vsel %vm940, %v935, %v939
      %v943 = vsel %vm940, %v937, %v933
      %v944 = vsel %vm940, %v939, %v935
      %v945 = vlaneseq
      %v946 = vshrl.u32 %v945, 7
      %v947 = vsub.s32 5, %v946
      %v948 = vrot.slane %v550, %v947
      %v949 = vlaneseq
      %v950 = vshrl.u32 %v949, 7
      %v951 = vsub.s32 5, %v950
      %v952 = vrot.slane %v551, %v951
      %v953 = vmul.f32 %v941, %v948
      %v954 = vmul.f32 %v943, %v952
      %v955 = vmul.f32 %v942, %v948
      %v956 = vmul.f32 %v944, %v952
      %957 = vrot.lane.b32.xlu0 %v825, 113
      %v958 = vpop.permute.xlu0 %957
      %959 = vrot.lane.b32.xlu0 %v706, 113
      %v960 = vpop.permute.xlu0 %959
      %961 = vrot.lane.b32.xlu0 %v826, 113
      %v962 = vpop.permute.xlu0 %961
      %963 = vrot.lane.b32.xlu0 %v708, 113
      %v964 = vpop.permute.xlu0 %963
      %vm965 = vcmp.lt.s32.totalorder %v839, 113
      %v966 = vsel %vm965, %v958, %v962
      %v967 = vsel %vm965, %v960, %v964
      %v968 = vsel %vm965, %v962, %v958
      %v969 = vsel %vm965, %v964, %v960
      %v970 = vlaneseq
      %v971 = vshrl.u32 %v970, 7
      %v972 = vsub.s32 6, %v971
      %v973 = vrot.slane %v550, %v972
      %v974 = vlaneseq
      %v975 = vshrl.u32 %v974, 7
      %v976 = vsub.s32 6, %v975
      %v977 = vrot.slane %v551, %v976
      %v978 = vmul.f32 %v966, %v973
      %v979 = vmul.f32 %v968, %v977
      %v980 = vmul.f32 %v967, %v973
      %v981 = vmul.f32 %v969, %v977
      %982 = vrot.lane.b32.xlu0 %v825, 112
      %v983 = vpop.permute.xlu0 %982
      %984 = vrot.lane.b32.xlu0 %v706, 112
      %v985 = vpop.permute.xlu0 %984
      %986 = vrot.lane.b32.xlu0 %v826, 112
      %v987 = vpop.permute.xlu0 %986
      %988 = vrot.lane.b32.xlu0 %v708, 112
      %v989 = vpop.permute.xlu0 %988
      %vm990 = vcmp.lt.s32.totalorder %v839, 112
      %v991 = vsel %vm990, %v983, %v987
      %v992 = vsel %vm990, %v985, %v989
      %v993 = vsel %vm990, %v987, %v983
      %v994 = vsel %vm990, %v989, %v985
      %v995 = vlaneseq
      %v996 = vshrl.u32 %v995, 7
      %v997 = vsub.s32 7, %v996
      %v998 = vrot.slane %v550, %v997
      %v999 = vlaneseq
      %v1000 = vshrl.u32 %v999, 7
      %v1001 = vsub.s32 7, %v1000
      %v1002 = vrot.slane %v551, %v1001
      %v1003 = vmul.f32 %v991, %v998
      %v1004 = vmul.f32 %v993, %v1002
      %v1005 = vmul.f32 %v992, %v998
      %v1006 = vmul.f32 %v994, %v1002
      %1007 = vrot.lane.b32.xlu0 %v825, 111
      %v1008 = vpop.permute.xlu0 %1007
      %1009 = vrot.lane.b32.xlu0 %v706, 111
      %v1010 = vpop.permute.xlu0 %1009
      %1011 = vrot.lane.b32.xlu0 %v826, 111
      %v1012 = vpop.permute.xlu0 %1011
      %1013 = vrot.lane.b32.xlu0 %v708, 111
      %v1014 = vpop.permute.xlu0 %1013
      %vm1015 = vcmp.lt.s32.totalorder %v839, 111
      %v1016 = vsel %vm1015, %v1008, %v1012
      %v1017 = vsel %vm1015, %v1010, %v1014
      %v1018 = vsel %vm1015, %v1012, %v1008
      %v1019 = vsel %vm1015, %v1014, %v1010
      %v1020 = vlaneseq
      %v1021 = vshrl.u32 %v1020, 7
      %v1022 = vsub.s32 0, %v1021
      %v1023 = vrot.slane %v552, %v1022
      %v1024 = vlaneseq
      %v1025 = vshrl.u32 %v1024, 7
      %v1026 = vsub.s32 0, %v1025
      %v1027 = vrot.slane %v553, %v1026
      %v1028 = vmul.f32 %v1016, %v1023
      %v1029 = vmul.f32 %v1018, %v1027
      %v1030 = vmul.f32 %v1017, %v1023
      %v1031 = vmul.f32 %v1019, %v1027
      %v1032 = vpack.c.bf16 %v855, %v853
      %v1033 = vpack.c.bf16 %v856, %v854
      %v1034 = vpack.c.bf16 %v880, %v878
      %v1035 = vpack.c.bf16 %v881, %v879
      %v1036 = vpack.c.bf16 %v905, %v903
      %v1037 = vpack.c.bf16 %v906, %v904
      %v1038 = vpack.c.bf16 %v930, %v928
      %v1039 = vpack.c.bf16 %v931, %v929
      %v1040 = vpack.c.bf16 %v706, %v825
      %v1041 = vpack.c.bf16 %v708, %v826
      %v1042 = vpack.c.bf16 %v955, %v953
      %v1043 = vpack.c.bf16 %v956, %v954
      %v1044 = vpack.c.bf16 %v980, %v978
      %v1045 = vpack.c.bf16 %v981, %v979
      %v1046 = vpack.c.bf16 %v1005, %v1003
      %v1047 = vpack.c.bf16 %v1006, %v1004
      %v1048 = vpack.c.bf16 %v1030, %v1028
      %v1049 = vpack.c.bf16 %v1031, %v1029
      %v1051 = vunpack.c.l.b16 %v827
      %v1052 = vunpack.c.h.b16 %v827
      %v1053 = vpack.c.b16 %v1051, %v1051
      %v1054 = vpack.c.b16 %v1052, %v1052
      %v1057 = vsel %vm561, %v1054, 0
      %1059 = vmatprep.subr.bf16.mxu0 %v1047
      %1060 = vmatpush1.bf16.msra.mxu0 %v1046
      %1061 = vmatprep.subr.bf16.mxu0 %v1045
      %1062 = vmatpush1.bf16.msra.mxu0 %v1044
      %1063 = vmatprep.subr.bf16.mxu0 %v1043
      %1064 = vmatpush1.bf16.msra.mxu0 %v1042
      %1065 = vmatprep.subr.bf16.mxu0 %v1041
      %1066 = vmatpush1.bf16.msra.mxu0 %v1040
      %1067 = vmatprep.subr.bf16.mxu0 %v1039
      %1068 = vmatpush1.bf16.msra.mxu0 %v1038
      %1069 = vmatprep.subr.bf16.mxu0 %v1037
      %1070 = vmatpush1.bf16.msra.mxu0 %v1036
      %1071 = vmatprep.subr.bf16.mxu0 %v1035
      %1072 = vmatpush1.bf16.msra.mxu0 %v1034
      %1073 = vmatprep.subr.bf16.mxu0 %v1033
      %1074 = vmatpush1.bf16.msra.mxu0 %v1032
      %1075 = vmatprep.subr.bf16.mxu0 0
      %1076 = vmatpush2.bf16.msra.mxu0 0
      %1077 = vmatprep.subr.bf16.mxu0 0
      %1078 = vmatpush2.bf16.msra.mxu0 0
      %1079 = vmatprep.subr.bf16.mxu0 0
      %1080 = vmatpush2.bf16.msra.mxu0 0
      %1081 = vmatprep.subr.bf16.mxu0 0
      %1082 = vmatpush2.bf16.msra.mxu0 0
      %1083 = vmatprep.subr.bf16.mxu0 0
      %1084 = vmatpush2.bf16.msra.mxu0 0
      %1085 = vmatprep.subr.bf16.mxu0 0
      %1086 = vmatpush2.bf16.msra.mxu0 0
      %1087 = vmatprep.subr.bf16.mxu0 0
      %1088 = vmatpush2.bf16.msra.mxu0 0
      %1089 = vmatprep.subr.bf16.mxu0 %v1049
      %1090 = vmatpush2.bf16.msra.mxu0 %v1048
      %1091 = vmatprep.mubr.bf16.mxu0 %v1057
      %1092 = vmatmul.mubr.bf16.gmra.mxu0 %v1053
      %v1093 = vpop.f32.mrf.mxu0
      %v1094 = vadd.f32 0.0, %v1093
      %v1095 = vpop.f32.mrf.mxu0
      %v1096 = vadd.f32 0.0, %v1095
      %v1097 = vpop.f32.mrf.mxu0
      %v1098 = vpop.f32.mrf.mxu0
      %1099 = vdwg.mxu0
      %1101 = vset.pattern.permute.xlu0 0
      %1102 = vperm.xlu0 %1101, %v828
      %v1103 = vpop.permute.xlu0 %1102
      %v1105 = vmul.f32 %v1094, %v1103
      %v1106 = vmul.f32 %v1096, %v1103
      %1108 = vset.pattern.permute.xlu0 0
      %1109 = vperm.xlu0 %1108, %v829
      %v1110 = vpop.permute.xlu0 %1109
      %v1112 = vadd.f32 %v1105, %v1110
      %v1113 = vadd.f32 %v1106, %v1110
      %v1114 = vmax.f32 %v1112, 0.0
      %v1115 = vmax.f32 %v1113, 0.0
      %v1116 = vld [vmem:[%s13] sm:$0xf]
      %v1117 = vld [vmem:[%s14] sm:$0xff]
      %v1118 = vld [vmem:[%s15] sm:$0xff]
      %1119 = vrot.lane.b32.xlu0 %v1114, 17
      %v1120 = vpop.permute.xlu0 %1119
      %1121 = vrot.lane.b32.xlu0 %v1115, 17
      %v1122 = vpop.permute.xlu0 %1121
      %v1123 = vsel %vm840, %v1120, %v1122
      %v1124 = vsel %vm840, %v1122, %v1120
      %v1125 = vmul.f32 %v1124, %v848
      %v1126 = vmul.f32 %v1123, %v852
      %1127 = vrot.lane.b32.xlu0 %v1114, 16
      %v1128 = vpop.permute.xlu0 %1127
      %1129 = vrot.lane.b32.xlu0 %v1115, 16
      %v1130 = vpop.permute.xlu0 %1129
      %v1131 = vsel %vm865, %v1128, %v1130
      %v1132 = vsel %vm865, %v1130, %v1128
      %v1133 = vmul.f32 %v1132, %v873
      %v1134 = vmul.f32 %v1131, %v877
      %1135 = vrot.lane.b32.xlu0 %v1114, 15
      %v1136 = vpop.permute.xlu0 %1135
      %1137 = vrot.lane.b32.xlu0 %v1115, 15
      %v1138 = vpop.permute.xlu0 %1137
      %v1139 = vsel %vm890, %v1136, %v1138
      %v1140 = vsel %vm890, %v1138, %v1136
      %v1141 = vmul.f32 %v1140, %v898
      %v1142 = vmul.f32 %v1139, %v902
      %1143 = vrot.lane.b32.xlu0 %v1114, 1
      %v1144 = vpop.permute.xlu0 %1143
      %1145 = vrot.lane.b32.xlu0 %v1115, 1
      %v1146 = vpop.permute.xlu0 %1145
      %v1147 = vsel %vm915, %v1144, %v1146
      %v1148 = vsel %vm915, %v1146, %v1144
      %v1149 = vmul.f32 %v1148, %v923
      %v1150 = vmul.f32 %v1147, %v927
      %1151 = vrot.lane.b32.xlu0 %v1114, 127
      %v1152 = vpop.permute.xlu0 %1151
      %1153 = vrot.lane.b32.xlu0 %v1115, 127
      %v1154 = vpop.permute.xlu0 %1153
      %v1155 = vsel %vm940, %v1152, %v1154
      %v1156 = vsel %vm940, %v1154, %v1152
      %v1157 = vmul.f32 %v1155, %v948
      %v1158 = vmul.f32 %v1156, %v952
      %1159 = vrot.lane.b32.xlu0 %v1114, 113
      %v1160 = vpop.permute.xlu0 %1159
      %1161 = vrot.lane.b32.xlu0 %v1115, 113
      %v1162 = vpop.permute.xlu0 %1161
      %v1163 = vsel %vm965, %v1160, %v1162
      %v1164 = vsel %vm965, %v1162, %v1160
      %v1165 = vmul.f32 %v1163, %v973
      %v1166 = vmul.f32 %v1164, %v977
      %1167 = vrot.lane.b32.xlu0 %v1114, 112
      %v1168 = vpop.permute.xlu0 %1167
      %1169 = vrot.lane.b32.xlu0 %v1115, 112
      %v1170 = vpop.permute.xlu0 %1169
      %v1171 = vsel %vm990, %v1168, %v1170
      %v1172 = vsel %vm990, %v1170, %v1168
      %v1173 = vmul.f32 %v1171, %v998
      %v1174 = vmul.f32 %v1172, %v1002
      %1175 = vrot.lane.b32.xlu0 %v1114, 111
      %v1176 = vpop.permute.xlu0 %1175
      %1177 = vrot.lane.b32.xlu0 %v1115, 111
      %v1178 = vpop.permute.xlu0 %1177
      %v1179 = vsel %vm1015, %v1176, %v1178
      %v1180 = vsel %vm1015, %v1178, %v1176
      %v1181 = vmul.f32 %v1179, %v1023
      %v1182 = vmul.f32 %v1180, %v1027
      %v1183 = vpack.c.bf16 %v1133, %v1125
      %v1184 = vpack.c.bf16 %v1134, %v1126
      %v1185 = vpack.c.bf16 %v1149, %v1141
      %v1186 = vpack.c.bf16 %v1150, %v1142
      %v1187 = vpack.c.bf16 %v1157, %v1114
      %v1188 = vpack.c.bf16 %v1158, %v1115
      %v1189 = vpack.c.bf16 %v1173, %v1165
      %v1190 = vpack.c.bf16 %v1174, %v1166
      %v1191 = vpack.c.bf16 %v1181, %v1181
      %v1192 = vpack.c.bf16 %v1182, %v1182
      %vm1193 = vcmask 588800
      %v1195 = vsel %vm1193, %v1116, 0
      %v1198 = vsel %vm727, %v1191, 0
      %v1201 = vsel %vm727, %v1192, 0
      %1203 = vmatprep.subr.bf16.mxu0 0
      %1204 = vmatpush1.bf16.msra.mxu0 0
      %1205 = vmatprep.subr.bf16.mxu0 0
      %1206 = vmatpush1.bf16.msra.mxu0 0
      %1207 = vmatprep.subr.bf16.mxu0 0
      %1208 = vmatpush1.bf16.msra.mxu0 0
      %1209 = vmatprep.subr.bf16.mxu0 %v1201
      %1210 = vmatpush1.bf16.msra.mxu0 %v1198
      %1211 = vmatprep.subr.bf16.mxu0 %v1190
      %1212 = vmatpush1.bf16.msra.mxu0 %v1189
      %1213 = vmatprep.subr.bf16.mxu0 %v1188
      %1214 = vmatpush1.bf16.msra.mxu0 %v1187
      %1215 = vmatprep.subr.bf16.mxu0 %v1186
      %1216 = vmatpush1.bf16.msra.mxu0 %v1185
      %1217 = vmatprep.subr.bf16.mxu0 %v1184
      %1218 = vmatpush1.bf16.msra.mxu0 %v1183
      %1219 = vmatprep.subr.bf16.mxu0 0
      %1220 = vmatpush2.bf16.msra.mxu0 0
      %1221 = vmatprep.subr.bf16.mxu0 0
      %1222 = vmatpush2.bf16.msra.mxu0 0
      %1223 = vmatprep.subr.bf16.mxu0 0
      %1224 = vmatpush2.bf16.msra.mxu0 0
      %1225 = vmatprep.subr.bf16.mxu0 0
      %1226 = vmatpush2.bf16.msra.mxu0 0
      %1227 = vmatprep.subr.bf16.mxu0 0
      %1228 = vmatpush2.bf16.msra.mxu0 0
      %1229 = vmatprep.subr.bf16.mxu0 0
      %1230 = vmatpush2.bf16.msra.mxu0 0
      %1231 = vmatprep.subr.bf16.mxu0 0
      %1232 = vmatpush2.bf16.msra.mxu0 0
      %1233 = vmatprep.subr.bf16.mxu0 0
      %1234 = vmatpush2.bf16.msra.mxu0 0
      %1235 = vmatprep.mubr.bf16.mxu0 0
      %1236 = vmatmul.mubr.bf16.gmra.mxu0 %v1195
      %v1237 = vpop.f32.mrf.mxu0
      %v1238 = vadd.f32 0.0, %v1237
      %v1239 = vpop.f32.mrf.mxu0
      %v1240 = vadd.f32 0.0, %v1239
      %v1241 = vpop.f32.mrf.mxu0
      %v1242 = vpop.f32.mrf.mxu0
      %1243 = vdwg.mxu0
      %1245 = vset.pattern.permute.xlu0 0
      %1246 = vperm.xlu0 %1245, %v1117
      %v1247 = vpop.permute.xlu0 %1246
      %v1249 = vmul.f32 %v1238, %v1247
      %v1250 = vmul.f32 %v1240, %v1247
      %1252 = vset.pattern.permute.xlu0 0
      %1253 = vperm.xlu0 %1252, %v1118
      %v1254 = vpop.permute.xlu0 %1253
      %v1256 = vadd.f32 %v1249, %v1254
      %v1257 = vadd.f32 %v1250, %v1254
      %v1258 = vmax.f32 %v1256, 0.0
      %v1259 = vmax.f32 %v1257, 0.0
      %1260 = vst [vmem:[%s543] sm:$0xff] %v1258
      %1261 = vst [vmem:[%s543 + $0x8] sm:$0xff] %v1259
      %p1262 = scmp.lt.s32.totalorder %s29, 1
      %s1263 = scalar_select %p1262, %s29, 1
      %s1264 = smul.addr %s1263, 2
      %s1265 = smul.addr %s1264, 8
      %s1266 = scalar_lea.vmem %s16, %s1265
      // Predicated region
      $region85: #{up_att_forward.1} parent=83 // pred_check
        %p1267 = pneg %p393
      $region86: #{up_att_forward.1} parent=83 // pred_check_branch
        %1269 = sbr.rel (%p1267) target = $region88
      $region87: #{up_att_forward.1} parent=83 // pred_region
        _
      $region88: #{up_att_forward.1} parent=83 // pred_fallthru
        _
    $region84: #{up_att_forward.1} parent=5 // pred_fallthru
      _
    %p1270 = scmp.le.s32.totalorder 2, %s24
    // Predicated region
    $region89: #{up_att_forward.1} parent=5 // pred_check
      %p1271 = pneg %p1270
    $region90: #{up_att_forward.1} parent=5 // pred_check_branch
      %1273 = sbr.rel (%p1271) target = $region92
    $region91: #{up_att_forward.1} parent=5 // pred_region
      %s1274 = ssub.s32 %s24, 2
      // Predicated region
      $region93: #{up_att_forward.1} parent=91 // pred_check
        %p1275 = pneg %p399
      $region94: #{up_att_forward.1} parent=91 // pred_check_branch
        %1277 = sbr.rel (%p1275) target = $region96
      $region95: #{up_att_forward.1} parent=91 // pred_region
        %p1278 = scmp.lt.s32.totalorder %s30, 1
        %s1279 = scalar_select %p1278, %s30, 1
        %s1280 = smul.addr %s1279, 2
        %s1281 = smul.addr %s1280, 8
        %s1282 = scalar_lea.vmem %s16, %s1281
      $region96: #{up_att_forward.1} parent=91 // pred_fallthru
        _
    $region92: #{up_att_forward.1} parent=5 // pred_fallthru
      _
  $region6: #{up_att_forward.1} parent=0 // loop_footer
    %s28 = sadd.s32 1, %s24
  $region7: #{up_att_forward.1} parent=0 // loop_footer_branch
    %23 = sbr.rel target = $region3
  $region8: #{up_att_forward.1} parent=0 // loop_exit
    _

</llo_original>
